<compile_context>
chip_gen: v7x
topology: tpu7x:2x2x1
jax: 0.10.0
libtpu: 0.0.40
codegen_flags: <defaults>
</compile_context>

<pallas_src>
import jax
import jax.numpy as jnp
from jax import lax
from jax.experimental import pallas as pl
from jax.experimental.pallas import tpu as pltpu

HIDDEN = 768      # hard-coded in the PyTorch module (LayerNorm(768), Linear(768*2, .))
EPS = 1e-5        # nn.LayerNorm default


def _device_kind():
    try:
        return jax.devices()[0].device_kind.lower()
    except Exception:
        return ""


def _layernorm(x, gamma, beta):
    mu = jnp.mean(x, axis=-1, keepdims=True)
    xc = x - mu
    var = jnp.mean(xc * xc, axis=-1, keepdims=True)
    return xc * lax.rsqrt(var + EPS) * gamma + beta


def _make_kernel(must, train, p_mix, inv_tokens, reduce_on_mxu):
    def kernel(*refs):
        it = iter(refs)
        text_ref = next(it)
        vid_ref = next(it)
        ctx_ref = next(it) if must else None
        ln_ref = next(it)                    # (4, 768): [gt, bt, gv, bv]
        w_ref = next(it)                     # (1536, out_pad), resident
        b_ref = next(it)                     # (1, out_pad), resident
        mask_ref = next(it) if train else None
        out_ref = next(it)
        vsum_ref = next(it)
        csum_ref = next(it) if must else None

        si = pl.program_id(1)
        n_si = pl.num_programs(1)

        # ---- init token-sum accumulators on the first token tile ------------
        @pl.when(si == 0)
        def _():
            vsum_ref[...] = jnp.zeros_like(vsum_ref)
            if must:
                csum_ref[...] = jnp.zeros_like(csum_ref)

        # ---- accumulate token sums in f32 -----------------------------------
        def token_sum(x_ref):
            x = x_ref[...]
            if reduce_on_mxu:
                # Push the reduction onto the MXU (batched ones @ block), so the
                # VALU stays off the critical path on v7x with bf16 streams.
                tb, ts, _ = x.shape
                ones = jnp.ones((tb, 1, ts), dtype=x.dtype)
                s = lax.dot_general(ones, x, (((2,), (1,)), ((0,), (0,))),
                                    preferred_element_type=jnp.float32)
                return s[:, 0, :]
            return jnp.sum(x.astype(jnp.float32), axis=1)

        vsum_ref[...] += token_sum(vid_ref)
        if must:
            csum_ref[...] += token_sum(ctx_ref)

        # ---- epilogue on the last token tile ---------------------------------
        @pl.when(si == n_si - 1)
        def _():
            ln = ln_ref[...]
            gt, bt, gv, bv = ln[0:1, :], ln[1:2, :], ln[2:3, :], ln[3:4, :]

            # text branch: LayerNorm on pooled BERT output
            t = _layernorm(text_ref[...].astype(jnp.float32), gt, bt)
            # video branch: token mean (= accumulated sum * 1/S) + LayerNorm
            v = _layernorm(vsum_ref[...] * inv_tokens, gv, bv)
            if must:
                c = _layernorm(csum_ref[...] * inv_tokens, gv, bv)
                v = (v * p_mix + c * (1.0 - p_mix)) * 0.5

            if train:
                # inverted-dropout mask (already scaled by 1/keep_prob)
                t = t * mask_ref[:, 0:HIDDEN]
                v = v * mask_ref[:, HIDDEN:2 * HIDDEN]

            # concat([t, v]) @ W + b  ==  t @ W[:768] + v @ W[768:] + b
            out = jnp.dot(t, w_ref[0:HIDDEN, :], preferred_element_type=jnp.float32)
            out = out + jnp.dot(v, w_ref[HIDDEN:2 * HIDDEN, :],
                                preferred_element_type=jnp.float32)
            out_ref[...] = (out + b_ref[...]).astype(out_ref.dtype)

    return kernel


def _choose_tiles(B, S, n_streams, itemsize, budget, buffers, ts_align,
                  prefer_multi_batch_tiles):
    """Pick (batch_tile, token_tile): grow the token tile first (long
    contiguous DMA bursts), then the batch tile up to 64, under `budget` bytes
    of multi-buffered vid/ctx stream blocks."""
    # batch tile must be a multiple of 8 (second-to-last dim of the (tb, 768)
    # text/output blocks) or equal to the full batch.
    tb_cands = sorted(d for d in range(8, min(B, 64) + 1, 8) if B % d == 0)
    if not tb_cands:
        tb_cands = [B]
    # token tile must be a multiple of 8 (16 for bf16 streams) or the full S.
    ts_cands = sorted({d for d in range(ts_align, S + 1, ts_align) if S % d == 0}
                      | {S}, reverse=True)

    def fits(tb, ts):
        return buffers * n_streams * tb * ts * HIDDEN * itemsize <= budget

    for ts in ts_cands:
        ok = [tb for tb in tb_cands if fits(tb, ts)]
        if not ok:
            continue
        if prefer_multi_batch_tiles:
            # v7x: keep >= 2 batch tiles so both TensorCores get work.
            multi = [tb for tb in ok if B // tb >= 2]
            if multi:
                ok = multi
        return max(ok), ts
    # Nothing fits the advisory budget: fall back to the smallest legal tiles
    # (vmem_limit is computed from the actual tile sizes below).
    return tb_cands[0], min(ts_cands)


def bert_videomae_head(text_pooled, vid_seq, ctx_seq, params, *, must=True,
                       check='train', p_drop=0.5, p_mix=0.6, seed=1234,
                       cast_streams_to_bf16=False,
                       stream_budget_bytes=None,
                       stream_buffer_count=2,
                       reduce_on_mxu=None):
    B, S, H = vid_seq.shape
    assert H == HIDDEN and text_pooled.shape == (B, HIDDEN)
    out_dim = params['w'].shape[1]
    train = (check == 'train') and float(p_drop) > 0.0

    kind = _device_kind()
    is_v5v6 = ('v5' in kind) or ('v6' in kind)
    if stream_budget_bytes is None:
        # v5e/v6e have 128 MiB VMEM -> big blocks; v7x (and unknown) only
        # 64 MiB/TC -> keep est*1.25 + 8 MiB comfortably under the cap.
        stream_budget_bytes = (48 << 20) if is_v5v6 else (28 << 20)
    vmem_cap = (120 << 20) if is_v5v6 else (60 << 20)
    if reduce_on_mxu is None:
        reduce_on_mxu = 'v7' in kind
    prefer_multi_batch_tiles = 'v7' in kind

    # ---- lane-dense output: pad out_dim up to a multiple of 128 -------------
    out_pad = -(-out_dim // 128) * 128
    w = params['w'].astype(jnp.float32)
    b = params['b'].astype(jnp.float32)
    if out_pad != out_dim:
        w = jnp.pad(w, ((0, 0), (0, out_pad - out_dim)))
        b = jnp.pad(b, (0, out_pad - out_dim))
    b = b.reshape(1, out_pad)

    # pack the four LayerNorm params into one resident (4, 768) block
    ln_pack = jnp.stack([params['gt'], params['bt'],
                         params['gv'], params['bv']]).astype(jnp.float32)

    # NOTE: a standalone cast here is a net HBM loss unless it fuses upstream
    # (jit the whole graph / have the backbone emit bf16); kept opt-in.
    if cast_streams_to_bf16:
        vid_seq = vid_seq.astype(jnp.bfloat16)
        if must:
            ctx_seq = ctx_seq.astype(jnp.bfloat16)

    stream_itemsize = jnp.dtype(vid_seq.dtype).itemsize
    ts_align = 16 if stream_itemsize == 2 else 8
    n_streams = 2 if must else 1
    tb, ts = _choose_tiles(B, S, n_streams, stream_itemsize, stream_budget_bytes,
                           stream_buffer_count, ts_align, prefer_multi_batch_tiles)
    grid = (B // tb, S // ts)

    # ---- dropout mask (precomputed: tiny, reproducible, interpret-safe) -----
    if train:
        keep_prob = 1.0 - float(p_drop)
        key = jax.random.PRNGKey(seed)
        keep = jax.random.bernoulli(key, keep_prob, (B, 2 * HIDDEN))
        scale = (1.0 / keep_prob) if keep_prob > 0.0 else 0.0
        drop_mask = keep.astype(jnp.float32) * scale
    else:
        drop_mask = None

    # ---- specs ----------------------------------------------------------------
    stream_kwargs = {}
    if stream_buffer_count != 2:
        stream_kwargs["pipeline_mode"] = pl.Buffered(stream_buffer_count)

    in_specs = [
        pl.BlockSpec((tb, HIDDEN), lambda bi, si: (bi, 0)),                 # text
        pl.BlockSpec((tb, ts, HIDDEN), lambda bi, si: (bi, si, 0),
                     **stream_kwargs),                                      # vid
    ]
    inputs = [text_pooled, vid_seq]
    if must:
        in_specs.append(pl.BlockSpec((tb, ts, HIDDEN), lambda bi, si: (bi, si, 0),
                                     **stream_kwargs))                      # ctx
        inputs.append(ctx_seq)
    in_specs.append(pl.BlockSpec((4, HIDDEN), lambda bi, si: (0, 0)))       # LN pack
    inputs.append(ln_pack)
    in_specs.append(pl.BlockSpec((2 * HIDDEN, out_pad), lambda bi, si: (0, 0)))  # W
    inputs.append(w)
    in_specs.append(pl.BlockSpec((1, out_pad), lambda bi, si: (0, 0)))      # bias
    inputs.append(b)
    if train:
        in_specs.append(pl.BlockSpec((tb, 2 * HIDDEN), lambda bi, si: (bi, 0)))  # mask
        inputs.append(drop_mask)

    out_spec = pl.BlockSpec((tb, out_pad), lambda bi, si: (bi, 0))

    scratch = [pltpu.VMEM((tb, HIDDEN), jnp.float32)]
    if must:
        scratch.append(pltpu.VMEM((tb, HIDDEN), jnp.float32))

    # explicit VMEM budget from the actual tile sizes, clamped per generation
    f32 = 4
    stream_bytes = stream_buffer_count * n_streams * tb * ts * HIDDEN * stream_itemsize
    resident_bytes = 2 * (tb * HIDDEN * jnp.dtype(text_pooled.dtype).itemsize
                          + 4 * HIDDEN * f32
                          + 2 * HIDDEN * out_pad * f32
                          + out_pad * f32
                          + tb * out_pad * f32)
    if train:
        resident_bytes += 2 * tb * 2 * HIDDEN * f32
    scratch_bytes = (1 + int(must)) * tb * HIDDEN * f32
    est = stream_bytes + resident_bytes + scratch_bytes
    vmem_limit = int(est * 1.25) + (8 << 20)
    vmem_limit = max(vmem_limit, 32 << 20)
    vmem_limit = min(vmem_limit, vmem_cap)

    kernel = _make_kernel(must, train, float(p_mix), 1.0 / S, reduce_on_mxu)

    out_padded = pl.pallas_call(
        kernel,
        out_shape=jax.ShapeDtypeStruct((B, out_pad), jnp.float32),
        grid_spec=pltpu.PrefetchScalarGridSpec(
            num_scalar_prefetch=0,
            grid=grid,
            in_specs=in_specs,
            out_specs=out_spec,
            scratch_shapes=scratch),
        compiler_params=pltpu.CompilerParams(
            dimension_semantics=("parallel", "arbitrary"),
            vmem_limit_bytes=vmem_limit),
    )(*inputs)

    return out_padded[:, :out_dim]


def init_params(key, out_dim):
    """Deterministic synthetic parameters matching the module's __init__ shapes."""
    k1, k2 = jax.random.split(key)
    in_dim = 2 * HIDDEN
    bound = 1.0 / (in_dim ** 0.5)
    return dict(
        gt=jnp.ones((HIDDEN,), jnp.float32),      # bert_norm weight
        bt=jnp.zeros((HIDDEN,), jnp.float32),     # bert_norm bias
        gv=jnp.ones((HIDDEN,), jnp.float32),      # vid_norm weight
        bv=jnp.zeros((HIDDEN,), jnp.float32),     # vid_norm bias
        # PyTorch nn.Linear weight is (out, in); stored transposed as (in, out).
        w=jax.random.uniform(k1, (in_dim, out_dim), jnp.float32, -bound, bound),
        b=jax.random.uniform(k2, (out_dim,), jnp.float32, -bound, bound),
    )


def reference_forward(text, vid, ctx, params, must=True, p_mix=0.6, mask=None):
    """Plain-JAX reference of the forward path (mask=None == eval mode)."""
    def ln(x, g, b):
        mu = x.mean(-1, keepdims=True)
        var = ((x - mu) ** 2).mean(-1, keepdims=True)
        return (x - mu) / jnp.sqrt(var + EPS) * g + b
    t = ln(text, params['gt'], params['bt'])
    v = ln(vid.mean(1), params['gv'], params['bv'])
    if must:
        c = ln(ctx.mean(1), params['gv'], params['bv'])
        v = (v * p_mix + c * (1.0 - p_mix)) / 2.0
    tav = jnp.concatenate([t, v], axis=1)
    if mask is not None:
        tav = tav * mask
    return jnp.dot(tav, params['w'], precision=lax.Precision.HIGHEST) + params['b']


if __name__ == "__main__":
    # TODO(synk): the pretrained RoBERTa / VideoMAE backbones are not reimplemented;
    # their encoder outputs (pooled text feature, video token sequences) are the inputs.
    B, S, OUT_DIM = 2, 8, 7
    key = jax.random.PRNGKey(0)
    k_text, k_vid, k_ctx, k_param = jax.random.split(key, 4)

    text_pooled = jax.random.normal(k_text, (B, HIDDEN), jnp.float32)
    vid_seq = jax.random.normal(k_vid, (B, S, HIDDEN), jnp.float32)
    ctx_seq = jax.random.normal(k_ctx, (B, S, HIDDEN), jnp.float32)
    params = init_params(k_param, OUT_DIM)

    ref_eval = reference_forward(text_pooled, vid_seq, ctx_seq, params, must=True)

    # Eval-mode run (no dropout) checked against a plain-JAX reference.
    out_eval = bert_videomae_head(text_pooled, vid_seq, ctx_seq, params,
                                  must=True, check='eval')
    jax.block_until_ready(out_eval)
    assert out_eval.shape == (B, OUT_DIM)
    assert jnp.allclose(out_eval, ref_eval, rtol=2e-3, atol=2e-3), "eval mismatch"

    # Same, with the MXU-based token reduction forced on (numerics check).
    out_mxu = bert_videomae_head(text_pooled, vid_seq, ctx_seq, params,
                                 must=True, check='eval', reduce_on_mxu=True)
    jax.block_until_ready(out_mxu)
    assert jnp.allclose(out_mxu, ref_eval, rtol=2e-3, atol=2e-3), "mxu-reduce mismatch"

    # Train-mode run: kernel applies the same precomputed inverted-dropout mask.
    seed, p_drop = 1234, 0.5
    out_train = bert_videomae_head(text_pooled, vid_seq, ctx_seq, params,
                                   must=True, check='train', p_drop=p_drop, seed=seed)
    jax.block_until_ready(out_train)
    keep = jax.random.bernoulli(jax.random.PRNGKey(seed), 1.0 - p_drop, (B, 2 * HIDDEN))
    mask = keep.astype(jnp.float32) / (1.0 - p_drop)
    ref_train = reference_forward(text_pooled, vid_seq, ctx_seq, params,
                                  must=True, mask=mask)
    assert out_train.shape == (B, OUT_DIM)
    assert jnp.allclose(out_train, ref_train, rtol=2e-3, atol=2e-3), "train mismatch"

    # bf16-stream variant (only beneficial when the cast fuses upstream; the
    # kernel also accepts bf16 vid/ctx inputs directly).  Accumulation error
    # grows with S, hence the looser tolerance.
    out_bf16 = bert_videomae_head(text_pooled, vid_seq, ctx_seq, params,
                                  must=True, check='eval',
                                  cast_streams_to_bf16=True)
    jax.block_until_ready(out_bf16)
    assert jnp.allclose(out_bf16, ref_eval, rtol=3e-2, atol=3e-2), "bf16 path mismatch"

    print("KERNEL_OK")
</pallas_src>

<mosaic_0001>
module attributes {stable_mosaic.version = 11 : i64} {
  func.func @kernel(%arg0: i32, %arg1: i32, %arg2: memref<2x768xf32, #tpu.memory_space<vmem>>, %arg3: memref<2x8x768xf32, #tpu.memory_space<vmem>>, %arg4: memref<2x8x768xf32, #tpu.memory_space<vmem>>, %arg5: memref<4x768xf32, #tpu.memory_space<vmem>>, %arg6: memref<1536x128xf32, #tpu.memory_space<vmem>>, %arg7: memref<1x128xf32, #tpu.memory_space<vmem>>, %arg8: memref<2x128xf32, #tpu.memory_space<vmem>>, %arg9: memref<2x768xf32, #tpu.memory_space<vmem>>, %arg10: memref<2x768xf32, #tpu.memory_space<vmem>>) attributes {dimension_semantics = [#tpu.dimension_semantics<parallel>, #tpu.dimension_semantics<arbitrary>], iteration_bounds = array<i64: 1, 1>, scalar_prefetch = 0 : i64, scratch_operands = 2 : i64, tpu.core_type = #tpu.core_type<tc>, window_params = [{transform_indices = @transform_0, window_bounds = array<i64: 2, 768>}, {transform_indices = @transform_1, window_bounds = array<i64: 2, 8, 768>}, {transform_indices = @transform_2, window_bounds = array<i64: 2, 8, 768>}, {pipeline_mode = #tpu.pipeline_mode<synchronous>, transform_indices = @transform_3, window_bounds = array<i64: 4, 768>}, {pipeline_mode = #tpu.pipeline_mode<synchronous>, transform_indices = @transform_4, window_bounds = array<i64: 1536, 128>}, {pipeline_mode = #tpu.pipeline_mode<synchronous>, transform_indices = @transform_5, window_bounds = array<i64: 1, 128>}, {transform_indices = @transform_6, window_bounds = array<i64: 2, 128>}]} {
    %c0_i32 = arith.constant 0 : i32
    %0 = arith.cmpi eq, %arg1, %c0_i32 : i32
    %1 = arith.extui %0 : i1 to i32
    %c0_i32_0 = arith.constant 0 : i32
    %2 = arith.cmpi ne, %1, %c0_i32_0 : i32
    scf.if %2 {
      %cst_17 = arith.constant 0.000000e+00 : f32
      %16 = vector.broadcast %cst_17 : f32 to vector<2x768xf32>
      %c0_18 = arith.constant 0 : index
      %c0_19 = arith.constant 0 : index
      %17 = vector.load %arg9[%c0_18, %c0_19] : memref<2x768xf32, #tpu.memory_space<vmem>>, vector<2x768xf32>
      tpu.vector_store %arg9[%c0_18, %c0_19], %16 {strides = array<i32>} : memref<2x768xf32, #tpu.memory_space<vmem>>, vector<2x768xf32>,
      %cst_20 = arith.constant 0.000000e+00 : f32
      %18 = vector.broadcast %cst_20 : f32 to vector<2x768xf32>
      %c0_21 = arith.constant 0 : index
      %c0_22 = arith.constant 0 : index
      %19 = vector.load %arg10[%c0_21, %c0_22] : memref<2x768xf32, #tpu.memory_space<vmem>>, vector<2x768xf32>
      tpu.vector_store %arg10[%c0_21, %c0_22], %18 {strides = array<i32>} : memref<2x768xf32, #tpu.memory_space<vmem>>, vector<2x768xf32>,
    } else {
    }
    %c0 = arith.constant 0 : index
    %c0_1 = arith.constant 0 : index
    %3 = vector.load %arg9[%c0, %c0_1] : memref<2x768xf32, #tpu.memory_space<vmem>>, vector<2x768xf32>
    %c0_2 = arith.constant 0 : index
    %c0_3 = arith.constant 0 : index
    %c0_4 = arith.constant 0 : index
    %4 = vector.load %arg3[%c0_2, %c0_3, %c0_4] : memref<2x8x768xf32, #tpu.memory_space<vmem>>, vector<2x8x768xf32>
    %cst = arith.constant dense<0.000000e+00> : vector<2x768xf32>
    %5 = vector.multi_reduction <add>, %4, %cst [1] : vector<2x8x768xf32> to vector<2x768xf32>
    %6 = arith.addf %3, %5 : vector<2x768xf32>
    %c0_5 = arith.constant 0 : index
    %c0_6 = arith.constant 0 : index
    %7 = vector.load %arg9[%c0_5, %c0_6] : memref<2x768xf32, #tpu.memory_space<vmem>>, vector<2x768xf32>
    tpu.vector_store %arg9[%c0_5, %c0_6], %6 {strides = array<i32>} : memref<2x768xf32, #tpu.memory_space<vmem>>, vector<2x768xf32>,
    %c0_7 = arith.constant 0 : index
    %c0_8 = arith.constant 0 : index
    %8 = vector.load %arg10[%c0_7, %c0_8] : memref<2x768xf32, #tpu.memory_space<vmem>>, vector<2x768xf32>
    %c0_9 = arith.constant 0 : index
    %c0_10 = arith.constant 0 : index
    %c0_11 = arith.constant 0 : index
    %9 = vector.load %arg4[%c0_9, %c0_10, %c0_11] : memref<2x8x768xf32, #tpu.memory_space<vmem>>, vector<2x8x768xf32>
    %cst_12 = arith.constant dense<0.000000e+00> : vector<2x768xf32>
    %10 = vector.multi_reduction <add>, %9, %cst_12 [1] : vector<2x8x768xf32> to vector<2x768xf32>
    %11 = arith.addf %8, %10 : vector<2x768xf32>
    %c0_13 = arith.constant 0 : index
    %c0_14 = arith.constant 0 : index
    %12 = vector.load %arg10[%c0_13, %c0_14] : memref<2x768xf32, #tpu.memory_space<vmem>>, vector<2x768xf32>
    tpu.vector_store %arg10[%c0_13, %c0_14], %11 {strides = array<i32>} : memref<2x768xf32, #tpu.memory_space<vmem>>, vector<2x768xf32>,
    %c0_i32_15 = arith.constant 0 : i32
    %13 = arith.cmpi eq, %arg1, %c0_i32_15 : i32
    %14 = arith.extui %13 : i1 to i32
    %c0_i32_16 = arith.constant 0 : i32
    %15 = arith.cmpi ne, %14, %c0_i32_16 : i32
    scf.if %15 {
      %c0_17 = arith.constant 0 : index
      %c0_18 = arith.constant 0 : index
      %16 = vector.load %arg5[%c0_17, %c0_18] : memref<4x768xf32, #tpu.memory_space<vmem>>, vector<4x768xf32>
      %17 = vector.extract_strided_slice %16 {offsets = [0, 0], sizes = [1, 768], strides = [1, 1]} : vector<4x768xf32> to vector<1x768xf32>
      %18 = vector.extract_strided_slice %16 {offsets = [1, 0], sizes = [1, 768], strides = [1, 1]} : vector<4x768xf32> to vector<1x768xf32>
      %19 = vector.extract_strided_slice %16 {offsets = [2, 0], sizes = [1, 768], strides = [1, 1]} : vector<4x768xf32> to vector<1x768xf32>
      %20 = vector.extract_strided_slice %16 {offsets = [3, 0], sizes = [1, 768], strides = [1, 1]} : vector<4x768xf32> to vector<1x768xf32>
      %c0_19 = arith.constant 0 : index
      %c0_20 = arith.constant 0 : index
      %21 = vector.load %arg2[%c0_19, %c0_20] : memref<2x768xf32, #tpu.memory_space<vmem>>, vector<2x768xf32>
      %cst_21 = arith.constant dense<0.000000e+00> : vector<2xf32>
      %22 = vector.multi_reduction <add>, %21, %cst_21 [1] : vector<2x768xf32> to vector<2xf32>
      %23 = vector.shape_cast %22 : vector<2xf32> to vector<2x1xf32>
      %cst_22 = arith.constant 7.680000e+02 : f32
      %24 = vector.broadcast %cst_22 : f32 to vector<2x1xf32>
      %25 = arith.divf %23, %24 : vector<2x1xf32>
      %26 = vector.broadcast %25 : vector<2x1xf32> to vector<2x768xf32>
      %27 = arith.subf %21, %26 : vector<2x768xf32>
      %28 = arith.mulf %27, %27 : vector<2x768xf32>
      %cst_23 = arith.constant dense<0.000000e+00> : vector<2xf32>
      %29 = vector.multi_reduction <add>, %28, %cst_23 [1] : vector<2x768xf32> to vector<2xf32>
      %30 = vector.shape_cast %29 : vector<2xf32> to vector<2x1xf32>
      %cst_24 = arith.constant 7.680000e+02 : f32
      %31 = vector.broadcast %cst_24 : f32 to vector<2x1xf32>
      %32 = arith.divf %30, %31 : vector<2x1xf32>
      %cst_25 = arith.constant 9.99999974E-6 : f32
      %33 = vector.broadcast %cst_25 : f32 to vector<2x1xf32>
      %34 = arith.addf %32, %33 : vector<2x1xf32>
      %35 = math.rsqrt %34 : vector<2x1xf32>
      %36 = vector.broadcast %35 : vector<2x1xf32> to vector<2x768xf32>
      %37 = arith.mulf %27, %36 : vector<2x768xf32>
      %38 = vector.broadcast %17 : vector<1x768xf32> to vector<2x768xf32>
      %39 = arith.mulf %37, %38 : vector<2x768xf32>
      %40 = vector.broadcast %18 : vector<1x768xf32> to vector<2x768xf32>
      %41 = arith.addf %39, %40 : vector<2x768xf32>
      %c0_26 = arith.constant 0 : index
      %c0_27 = arith.constant 0 : index
      %42 = vector.load %arg9[%c0_26, %c0_27] : memref<2x768xf32, #tpu.memory_space<vmem>>, vector<2x768xf32>
      %cst_28 = arith.constant 1.250000e-01 : f32
      %43 = vector.broadcast %cst_28 : f32 to vector<2x768xf32>
      %44 = arith.mulf %42, %43 : vector<2x768xf32>
      %cst_29 = arith.constant dense<0.000000e+00> : vector<2xf32>
      %45 = vector.multi_reduction <add>, %44, %cst_29 [1] : vector<2x768xf32> to vector<2xf32>
      %46 = vector.shape_cast %45 : vector<2xf32> to vector<2x1xf32>
      %cst_30 = arith.constant 7.680000e+02 : f32
      %47 = vector.broadcast %cst_30 : f32 to vector<2x1xf32>
      %48 = arith.divf %46, %47 : vector<2x1xf32>
      %49 = vector.broadcast %48 : vector<2x1xf32> to vector<2x768xf32>
      %50 = arith.subf %44, %49 : vector<2x768xf32>
      %51 = arith.mulf %50, %50 : vector<2x768xf32>
      %cst_31 = arith.constant dense<0.000000e+00> : vector<2xf32>
      %52 = vector.multi_reduction <add>, %51, %cst_31 [1] : vector<2x768xf32> to vector<2xf32>
      %53 = vector.shape_cast %52 : vector<2xf32> to vector<2x1xf32>
      %cst_32 = arith.constant 7.680000e+02 : f32
      %54 = vector.broadcast %cst_32 : f32 to vector<2x1xf32>
      %55 = arith.divf %53, %54 : vector<2x1xf32>
      %cst_33 = arith.constant 9.99999974E-6 : f32
      %56 = vector.broadcast %cst_33 : f32 to vector<2x1xf32>
      %57 = arith.addf %55, %56 : vector<2x1xf32>
      %58 = math.rsqrt %57 : vector<2x1xf32>
      %59 = vector.broadcast %58 : vector<2x1xf32> to vector<2x768xf32>
      %60 = arith.mulf %50, %59 : vector<2x768xf32>
      %61 = vector.broadcast %19 : vector<1x768xf32> to vector<2x768xf32>
      %62 = arith.mulf %60, %61 : vector<2x768xf32>
      %63 = vector.broadcast %20 : vector<1x768xf32> to vector<2x768xf32>
      %64 = arith.addf %62, %63 : vector<2x768xf32>
      %c0_34 = arith.constant 0 : index
      %c0_35 = arith.constant 0 : index
      %65 = vector.load %arg10[%c0_34, %c0_35] : memref<2x768xf32, #tpu.memory_space<vmem>>, vector<2x768xf32>
      %cst_36 = arith.constant 1.250000e-01 : f32
      %66 = vector.broadcast %cst_36 : f32 to vector<2x768xf32>
      %67 = arith.mulf %65, %66 : vector<2x768xf32>
      %cst_37 = arith.constant dense<0.000000e+00> : vector<2xf32>
      %68 = vector.multi_reduction <add>, %67, %cst_37 [1] : vector<2x768xf32> to vector<2xf32>
      %69 = vector.shape_cast %68 : vector<2xf32> to vector<2x1xf32>
      %cst_38 = arith.constant 7.680000e+02 : f32
      %70 = vector.broadcast %cst_38 : f32 to vector<2x1xf32>
      %71 = arith.divf %69, %70 : vector<2x1xf32>
      %72 = vector.broadcast %71 : vector<2x1xf32> to vector<2x768xf32>
      %73 = arith.subf %67, %72 : vector<2x768xf32>
      %74 = arith.mulf %73, %73 : vector<2x768xf32>
      %cst_39 = arith.constant dense<0.000000e+00> : vector<2xf32>
      %75 = vector.multi_reduction <add>, %74, %cst_39 [1] : vector<2x768xf32> to vector<2xf32>
      %76 = vector.shape_cast %75 : vector<2xf32> to vector<2x1xf32>
      %cst_40 = arith.constant 7.680000e+02 : f32
      %77 = vector.broadcast %cst_40 : f32 to vector<2x1xf32>
      %78 = arith.divf %76, %77 : vector<2x1xf32>
      %cst_41 = arith.constant 9.99999974E-6 : f32
      %79 = vector.broadcast %cst_41 : f32 to vector<2x1xf32>
      %80 = arith.addf %78, %79 : vector<2x1xf32>
      %81 = math.rsqrt %80 : vector<2x1xf32>
      %82 = vector.broadcast %81 : vector<2x1xf32> to vector<2x768xf32>
      %83 = arith.mulf %73, %82 : vector<2x768xf32>
      %84 = vector.broadcast %19 : vector<1x768xf32> to vector<2x768xf32>
      %85 = arith.mulf %83, %84 : vector<2x768xf32>
      %86 = vector.broadcast %20 : vector<1x768xf32> to vector<2x768xf32>
      %87 = arith.addf %85, %86 : vector<2x768xf32>
      %cst_42 = arith.constant 6.000000e-01 : f32
      %88 = vector.broadcast %cst_42 : f32 to vector<2x768xf32>
      %89 = arith.mulf %64, %88 : vector<2x768xf32>
      %cst_43 = arith.constant 4.000000e-01 : f32
      %90 = vector.broadcast %cst_43 : f32 to vector<2x768xf32>
      %91 = arith.mulf %87, %90 : vector<2x768xf32>
      %92 = arith.addf %89, %91 : vector<2x768xf32>
      %cst_44 = arith.constant 5.000000e-01 : f32
      %93 = vector.broadcast %cst_44 : f32 to vector<2x768xf32>
      %94 = arith.mulf %92, %93 : vector<2x768xf32>
      %c0_45 = arith.constant 0 : index
      %c0_46 = arith.constant 0 : index
      %95 = vector.load %arg6[%c0_45, %c0_46] : memref<1536x128xf32, #tpu.memory_space<vmem>>, vector<768x128xf32>
      %cst_47 = arith.constant dense<0.000000e+00> : vector<2x128xf32>
      %96 = tpu.matmul %41, %95, %cst_47 {dimension_numbers = #tpu.dot_dimension_numbers<[1], [0], [0], [1], [0, 0, 1, 1], [], []>} : vector<2x768xf32>, vector<768x128xf32>, vector<2x128xf32> -> vector<2x128xf32>
      %c768 = arith.constant 768 : index
      %c0_48 = arith.constant 0 : index
      %97 = vector.load %arg6[%c768, %c0_48] : memref<1536x128xf32, #tpu.memory_space<vmem>>, vector<768x128xf32>
      %cst_49 = arith.constant dense<0.000000e+00> : vector<2x128xf32>
      %98 = tpu.matmul %94, %97, %cst_49 {dimension_numbers = #tpu.dot_dimension_numbers<[1], [0], [0], [1], [0, 0, 1, 1], [], []>} : vector<2x768xf32>, vector<768x128xf32>, vector<2x128xf32> -> vector<2x128xf32>
      %99 = arith.addf %96, %98 : vector<2x128xf32>
      %c0_50 = arith.constant 0 : index
      %c0_51 = arith.constant 0 : index
      %100 = vector.load %arg7[%c0_50, %c0_51] : memref<1x128xf32, #tpu.memory_space<vmem>>, vector<1x128xf32>
      %101 = vector.broadcast %100 : vector<1x128xf32> to vector<2x128xf32>
      %102 = arith.addf %99, %101 : vector<2x128xf32>
      %c0_52 = arith.constant 0 : index
      %c0_53 = arith.constant 0 : index
      %103 = vector.load %arg8[%c0_52, %c0_53] : memref<2x128xf32, #tpu.memory_space<vmem>>, vector<2x128xf32>
      tpu.vector_store %arg8[%c0_52, %c0_53], %102 {strides = array<i32>} : memref<2x128xf32, #tpu.memory_space<vmem>>, vector<2x128xf32>,
    } else {
    }
    return
  }
  func.func @transform_0(%arg0: i32, %arg1: i32) -> (i32, i32) {
    %c0_i32 = arith.constant 0 : i32
    %c0_i32_0 = arith.constant 0 : i32
    return %arg0, %c0_i32 : i32, i32
  }
  func.func @transform_1(%arg0: i32, %arg1: i32) -> (i32, i32, i32) {
    %c0_i32 = arith.constant 0 : i32
    %c0_i32_0 = arith.constant 0 : i32
    return %arg0, %arg1, %c0_i32 : i32, i32, i32
  }
  func.func @transform_2(%arg0: i32, %arg1: i32) -> (i32, i32, i32) {
    %c0_i32 = arith.constant 0 : i32
    %c0_i32_0 = arith.constant 0 : i32
    return %arg0, %arg1, %c0_i32 : i32, i32, i32
  }
  func.func @transform_3(%arg0: i32, %arg1: i32) -> (i32, i32) {
    %c0_i32 = arith.constant 0 : i32
    %c0_i32_0 = arith.constant 0 : i32
    %c0_i32_1 = arith.constant 0 : i32
    return %c0_i32, %c0_i32_0 : i32, i32
  }
  func.func @transform_4(%arg0: i32, %arg1: i32) -> (i32, i32) {
    %c0_i32 = arith.constant 0 : i32
    %c0_i32_0 = arith.constant 0 : i32
    %c0_i32_1 = arith.constant 0 : i32
    return %c0_i32, %c0_i32_0 : i32, i32
  }
  func.func @transform_5(%arg0: i32, %arg1: i32) -> (i32, i32) {
    %c0_i32 = arith.constant 0 : i32
    %c0_i32_0 = arith.constant 0 : i32
    %c0_i32_1 = arith.constant 0 : i32
    return %c0_i32, %c0_i32_0 : i32, i32
  }
  func.func @transform_6(%arg0: i32, %arg1: i32) -> (i32, i32) {
    %c0_i32 = arith.constant 0 : i32
    %c0_i32_0 = arith.constant 0 : i32
    return %arg0, %c0_i32 : i32, i32
  }
}

</mosaic_0001>

<llo_original>
// kernel: tpu_custom_call.1
$region0: #{tpu_custom_call.1}
  #allocation0 [shape = 'u32[]', space=smem, size = 0x4, offset = 0x4, fixed_abs, tag = 'smem constant byte address 0x4 - core index']
  #allocation1 [shape = 'u32[144,128]{1,0:T(1,128)}', space=vmem, size = 0x12000, scoped, tag = 'internal scratch']
  #allocation2 [shape = 'f32[2,768]{1,0:T(2,128)}', space=vmem, size = 0x1800, scoped, tag = 'scratch operand']
  #allocation3 [shape = 'f32[2,768]{1,0:T(2,128)}', space=vmem, size = 0x1800, scoped, tag = 'scratch operand']
  %s0 = inlined_call_operand.hbm [shape: f32[2,768], index: 0, kind: input, shape index: {}]
  %s1 = inlined_call_operand.hbm [shape: f32[2,8,768], index: 1, kind: input, shape index: {}]
  %s2 = inlined_call_operand.hbm [shape: f32[2,8,768], index: 2, kind: input, shape index: {}]
  %s3 = inlined_call_operand.hbm [shape: f32[4,768], index: 3, kind: input, shape index: {}]
  %s4 = inlined_call_operand.hbm [shape: f32[1536,128], index: 4, kind: input, shape index: {}]
  %s5 = inlined_call_operand.vmem [shape: f32[1,128], index: 5, kind: input, shape index: {}]
  %s6 = inlined_call_operand.hbm [shape: f32[2,128], index: 6, kind: output, shape index: {}]
  %s7 = sld [smem:[#allocation0]]
  $region62: #{tpu_custom_call.1} parent=0
    _
  %s9 = ssub.s32 1, %s7
  %s10 = scalar_select 0, %s9, %s7
  $region1: #{tpu_custom_call.1} parent=0
    #allocation4 [shape = 'u8[6144]{0}', space=vmem, size = 0x1800, scoped, tag = 'input window, operand 0, single buffered']
    #allocation5 [shape = 's32[1]{0}', space=sflag, size = 0x4, scoped, tag = 'scoped memory for tpu_custom_call.1']
    #allocation6 [shape = 's32[1]{0}', space=sflag, size = 0x4, scoped, tag = 'scoped memory for tpu_custom_call.1']
    #allocation7 [shape = 'u8[49152]{0}', space=vmem, size = 0xc000, scoped, tag = 'input window, operand 1, single buffered']
    #allocation8 [shape = 's32[1]{0}', space=sflag, size = 0x4, scoped, tag = 'scoped memory for tpu_custom_call.1']
    #allocation9 [shape = 'u8[49152]{0}', space=vmem, size = 0xc000, scoped, tag = 'input window, operand 2, single buffered']
    #allocation10 [shape = 'u8[12288]{0}', space=vmem, size = 0x3000, scoped, tag = 'input window, operand 3, single buffered']
    #allocation11 [shape = 's32[1]{0}', space=sflag, size = 0x4, scoped, tag = 'scoped memory for tpu_custom_call.1']
    #allocation12 [shape = 'u8[786432]{0}', space=vmem, size = 0xc0000, scoped, tag = 'input window, operand 4, single buffered']
    #allocation13 [shape = 'u8[1024]{0}', space=vmem, size = 0x400, scoped, tag = 'output window, operand 0, single buffered']
    %11 = vsyncpa [#allocation5], 0
    %12 = vsyncpa [#allocation8], 0
    %13 = vsyncpa [#allocation11], 0
    %14 = vsyncpa [#allocation6], 0
    // Predicated region
    $region2: #{tpu_custom_call.1} parent=1 // pred_check
      _
    $region3: #{tpu_custom_call.1} parent=1 // pred_check_branch
      %16 = sbr.rel (0) target = $region5
    $region4: #{tpu_custom_call.1} parent=1 // pred_region
      %s18 = ssub.s32 192, 192
      %19 = vsyncadd [#allocation5], %s18
      %s21 = sshll.u32 [#allocation4], 4
      %s22 = int_to_ptr.vmem [resolvable:$true] %s21
      %24 = dma.hbm_to_vmem [thread:$0]  %s0, 192, %s22, [#allocation5]
    $region5: #{tpu_custom_call.1} parent=1 // pred_fallthru
      _
    // Predicated region
    $region6: #{tpu_custom_call.1} parent=1 // pred_check
      _
    $region7: #{tpu_custom_call.1} parent=1 // pred_check_branch
      %26 = sbr.rel (0) target = $region9
    $region8: #{tpu_custom_call.1} parent=1 // pred_region
      %s28 = ssub.s32 1536, 1536
      %29 = vsyncadd [#allocation8], %s28
      %s30 = sshll.u32 [#allocation7], 4
      %s31 = int_to_ptr.vmem [resolvable:$true] %s30
      %36 = dma.hbm_to_vmem [thread:$0]  %s1, 1536, %s31, [#allocation8], 768, 768, 48
    $region9: #{tpu_custom_call.1} parent=1 // pred_fallthru
      _
    // Predicated region
    $region10: #{tpu_custom_call.1} parent=1 // pred_check
      _
    $region11: #{tpu_custom_call.1} parent=1 // pred_check_branch
      %38 = sbr.rel (0) target = $region13
    $region12: #{tpu_custom_call.1} parent=1 // pred_region
      %s40 = ssub.s32 1536, 1536
      %41 = vsyncadd [#allocation8], %s40
      %s42 = sshll.u32 [#allocation9], 4
      %s43 = int_to_ptr.vmem [resolvable:$true] %s42
      %48 = dma.hbm_to_vmem [thread:$0]  %s2, 1536, %s43, [#allocation8], 768, 768, 48
    $region13: #{tpu_custom_call.1} parent=1 // pred_fallthru
      _
    // Predicated region
    $region14: #{tpu_custom_call.1} parent=1 // pred_check
      _
    $region15: #{tpu_custom_call.1} parent=1 // pred_check_branch
      %50 = sbr.rel (0) target = $region17
    $region16: #{tpu_custom_call.1} parent=1 // pred_region
      %s52 = ssub.s32 384, 384
      %53 = vsyncadd [#allocation11], %s52
      %s55 = sshll.u32 [#allocation10], 4
      %s56 = int_to_ptr.vmem [resolvable:$true] %s55
      %58 = dma.hbm_to_vmem [thread:$0]  %s3, 384, %s56, [#allocation11]
    $region17: #{tpu_custom_call.1} parent=1 // pred_fallthru
      _
    // Predicated region
    $region18: #{tpu_custom_call.1} parent=1 // pred_check
      _
    $region19: #{tpu_custom_call.1} parent=1 // pred_check_branch
      %60 = sbr.rel (0) target = $region21
    $region20: #{tpu_custom_call.1} parent=1 // pred_region
      %s62 = ssub.s32 24576, 24576
      %63 = vsyncadd [#allocation11], %s62
      %s64 = sshll.u32 [#allocation12], 4
      %s65 = int_to_ptr.vmem [resolvable:$true] %s64
      %70 = dma.hbm_to_vmem [thread:$0]  %s4, 24576, %s65, [#allocation11], 128, 128, 8
    $region21: #{tpu_custom_call.1} parent=1 // pred_fallthru
      _
    // Predicated region
    $region22: #{tpu_custom_call.1} parent=1 // pred_check
      _
    $region23: #{tpu_custom_call.1} parent=1 // pred_check_branch
      %72 = sbr.rel (0) target = $region25
    $region24: #{tpu_custom_call.1} parent=1 // pred_region
      _
    $region25: #{tpu_custom_call.1} parent=1 // pred_fallthru
      _
    // Predicated region
    $region26: #{tpu_custom_call.1} parent=1 // pred_check
      _
    $region27: #{tpu_custom_call.1} parent=1 // pred_check_branch
      %74 = sbr.rel (0) target = $region29
    $region28: #{tpu_custom_call.1} parent=1 // pred_region
      %75 = dma.done [#allocation5], 192
    $region29: #{tpu_custom_call.1} parent=1 // pred_fallthru
      _
    // Predicated region
    $region30: #{tpu_custom_call.1} parent=1 // pred_check
      _
    $region31: #{tpu_custom_call.1} parent=1 // pred_check_branch
      %77 = sbr.rel (0) target = $region33
    $region32: #{tpu_custom_call.1} parent=1 // pred_region
      %78 = dma.done [#allocation8], 1536
    $region33: #{tpu_custom_call.1} parent=1 // pred_fallthru
      _
    // Predicated region
    $region34: #{tpu_custom_call.1} parent=1 // pred_check
      _
    $region35: #{tpu_custom_call.1} parent=1 // pred_check_branch
      %80 = sbr.rel (0) target = $region37
    $region36: #{tpu_custom_call.1} parent=1 // pred_region
      %81 = dma.done [#allocation8], 1536
    $region37: #{tpu_custom_call.1} parent=1 // pred_fallthru
      _
    // Predicated region
    $region38: #{tpu_custom_call.1} parent=1 // pred_check
      _
    $region39: #{tpu_custom_call.1} parent=1 // pred_check_branch
      %83 = sbr.rel (0) target = $region41
    $region40: #{tpu_custom_call.1} parent=1 // pred_region
      %84 = dma.done [#allocation11], 384
    $region41: #{tpu_custom_call.1} parent=1 // pred_fallthru
      _
    // Predicated region
    $region42: #{tpu_custom_call.1} parent=1 // pred_check
      _
    $region43: #{tpu_custom_call.1} parent=1 // pred_check_branch
      %86 = sbr.rel (0) target = $region45
    $region44: #{tpu_custom_call.1} parent=1 // pred_region
      %87 = dma.done [#allocation11], 24576
    $region45: #{tpu_custom_call.1} parent=1 // pred_fallthru
      _
    %p88 = scmp.eq.s32.totalorder 0, 0
    // Predicated region
    $region46: #{tpu_custom_call.1} parent=1 // pred_check
      %p89 = pneg %p88
    $region47: #{tpu_custom_call.1} parent=1 // pred_check_branch
      %91 = sbr.rel (%p89) target = $region49
    $region48: #{tpu_custom_call.1} parent=1 // pred_region
      %92 = vst [vmem:[#allocation2] sm:$0xff] 0.0
      %93 = vst [vmem:[#allocation2 + $0x8] sm:$0xf] 0.0
      %94 = vst [vmem:[#allocation3] sm:$0xff] 0.0
      %95 = vst [vmem:[#allocation3 + $0x8] sm:$0xf] 0.0
    $region49: #{tpu_custom_call.1} parent=1 // pred_fallthru
      _
    %v96 = vld [vmem:[#allocation2] sm:$0xff]
    %v97 = vld [vmem:[#allocation2 + $0x8] sm:$0xf]
    %v98 = vld [vmem:[#allocation7] sm:$0xff]
    %v99 = vld [vmem:[#allocation7 + $0x8] sm:$0xff]
    %v100 = vld [vmem:[#allocation7 + $0x10] sm:$0xff]
    %v101 = vld [vmem:[#allocation7 + $0x18] sm:$0xff]
    %v102 = vld [vmem:[#allocation7 + $0x20] sm:$0xff]
    %v103 = vld [vmem:[#allocation7 + $0x28] sm:$0xff]
    %v104 = vld [vmem:[#allocation7 + $0x30] sm:$0xff]
    %v105 = vld [vmem:[#allocation7 + $0x38] sm:$0xff]
    %v106 = vld [vmem:[#allocation7 + $0x40] sm:$0xff]
    %v107 = vld [vmem:[#allocation7 + $0x48] sm:$0xff]
    %v108 = vld [vmem:[#allocation7 + $0x50] sm:$0xff]
    %v109 = vld [vmem:[#allocation7 + $0x58] sm:$0xff]
    %v110 = vrot.slane %v98, 4
    %v111 = vadd.f32 %v98, %v110
    %v112 = vrot.slane %v111, 2
    %v113 = vadd.f32 %v111, %v112
    %v114 = vrot.slane %v113, 1
    %v115 = vadd.f32 %v113, %v114
    %v116 = vrot.slane %v99, 4
    %v117 = vadd.f32 %v99, %v116
    %v118 = vrot.slane %v117, 2
    %v119 = vadd.f32 %v117, %v118
    %v120 = vrot.slane %v119, 1
    %v121 = vadd.f32 %v119, %v120
    %v122 = vrot.slane %v100, 4
    %v123 = vadd.f32 %v100, %v122
    %v124 = vrot.slane %v123, 2
    %v125 = vadd.f32 %v123, %v124
    %v126 = vrot.slane %v125, 1
    %v127 = vadd.f32 %v125, %v126
    %v128 = vrot.slane %v101, 4
    %v129 = vadd.f32 %v101, %v128
    %v130 = vrot.slane %v129, 2
    %v131 = vadd.f32 %v129, %v130
    %v132 = vrot.slane %v131, 1
    %v133 = vadd.f32 %v131, %v132
    %v134 = vrot.slane %v102, 4
    %v135 = vadd.f32 %v102, %v134
    %v136 = vrot.slane %v135, 2
    %v137 = vadd.f32 %v135, %v136
    %v138 = vrot.slane %v137, 1
    %v139 = vadd.f32 %v137, %v138
    %v140 = vrot.slane %v103, 4
    %v141 = vadd.f32 %v103, %v140
    %v142 = vrot.slane %v141, 2
    %v143 = vadd.f32 %v141, %v142
    %v144 = vrot.slane %v143, 1
    %v145 = vadd.f32 %v143, %v144
    %v146 = vrot.slane %v104, 4
    %v147 = vadd.f32 %v104, %v146
    %v148 = vrot.slane %v147, 2
    %v149 = vadd.f32 %v147, %v148
    %v150 = vrot.slane %v149, 1
    %v151 = vadd.f32 %v149, %v150
    %v152 = vrot.slane %v105, 4
    %v153 = vadd.f32 %v105, %v152
    %v154 = vrot.slane %v153, 2
    %v155 = vadd.f32 %v153, %v154
    %v156 = vrot.slane %v155, 1
    %v157 = vadd.f32 %v155, %v156
    %v158 = vrot.slane %v106, 4
    %v159 = vadd.f32 %v106, %v158
    %v160 = vrot.slane %v159, 2
    %v161 = vadd.f32 %v159, %v160
    %v162 = vrot.slane %v161, 1
    %v163 = vadd.f32 %v161, %v162
    %v164 = vrot.slane %v107, 4
    %v165 = vadd.f32 %v107, %v164
    %v166 = vrot.slane %v165, 2
    %v167 = vadd.f32 %v165, %v166
    %v168 = vrot.slane %v167, 1
    %v169 = vadd.f32 %v167, %v168
    %v170 = vrot.slane %v108, 4
    %v171 = vadd.f32 %v108, %v170
    %v172 = vrot.slane %v171, 2
    %v173 = vadd.f32 %v171, %v172
    %v174 = vrot.slane %v173, 1
    %v175 = vadd.f32 %v173, %v174
    %v176 = vrot.slane %v109, 4
    %v177 = vadd.f32 %v109, %v176
    %v178 = vrot.slane %v177, 2
    %v179 = vadd.f32 %v177, %v178
    %v180 = vrot.slane %v179, 1
    %v181 = vadd.f32 %v179, %v180
    %v194 = vcombine.low %v115, %v121
    %v195 = vcombine.low %v127, %v133
    %v197 = vunpack.c.l.s4 1983009808
    %v198 = vunpack.c.0.s8 %v197
    %v199 = vlaneseq
    %v200 = vshrl.u32 %v199, 7
    %v201 = vsub.s32 %v198, %v200
    %v202 = vrot.slane %v194, %v201
    %v204 = vunpack.c.l.s4 1983009808
    %v205 = vunpack.c.0.s8 %v204
    %v206 = vlaneseq
    %v207 = vshrl.u32 %v206, 7
    %v208 = vsub.s32 %v205, %v207
    %v209 = vrot.slane %v195, %v208
    %v210 = vcombine.low %v202, %v209
    %v211 = vcombine.low %v139, %v145
    %v213 = vunpack.c.l.s4 1983009808
    %v214 = vunpack.c.0.s8 %v213
    %v215 = vlaneseq
    %v216 = vshrl.u32 %v215, 7
    %v217 = vsub.s32 %v214, %v216
    %v218 = vrot.slane %v211, %v217
    %v219 = vcombine.low %v151, %v157
    %v220 = vcombine.low %v163, %v169
    %v222 = vunpack.c.l.s4 1983009808
    %v223 = vunpack.c.0.s8 %v222
    %v224 = vlaneseq
    %v225 = vshrl.u32 %v224, 7
    %v226 = vsub.s32 %v223, %v225
    %v227 = vrot.slane %v219, %v226
    %v229 = vunpack.c.l.s4 1983009808
    %v230 = vunpack.c.0.s8 %v229
    %v231 = vlaneseq
    %v232 = vshrl.u32 %v231, 7
    %v233 = vsub.s32 %v230, %v232
    %v234 = vrot.slane %v220, %v233
    %v235 = vcombine.low %v227, %v234
    %v236 = vcombine.low %v175, %v181
    %v238 = vunpack.c.l.s4 1983009808
    %v239 = vunpack.c.0.s8 %v238
    %v240 = vlaneseq
    %v241 = vshrl.u32 %v240, 7
    %v242 = vsub.s32 %v239, %v241
    %v243 = vrot.slane %v236, %v242
    %vm244 = vcmask 1044484
    %v245 = vsel %vm244, %v210, %v210
    %vm246 = vcmask 1046534
    %v247 = vsel %vm246, %v210, %v245
    %v248 = vrot.slane %v235, 7
    %vm249 = vcmask 1041409
    %v250 = vsel %vm249, %v248, %v247
    %vm251 = vcmask 1043459
    %v252 = vsel %vm251, %v248, %v250
    %vm253 = vcmask 1045509
    %v254 = vsel %vm253, %v248, %v252
    %vm255 = vcmask 1047559
    %v256 = vsel %vm255, %v248, %v254
    %v257 = vsel %vm244, %v218, %v218
    %v258 = vsel %vm246, %v218, %v257
    %v259 = vrot.slane %v243, 7
    %v260 = vsel %vm249, %v259, %v258
    %v261 = vsel %vm251, %v259, %v260
    %v262 = vsel %vm253, %v259, %v261
    %v263 = vsel %vm255, %v259, %v262
    %v266 = vadd.f32 %v96, %v256
    %v267 = vadd.f32 %v97, %v263
    %268 = vst [vmem:[#allocation2] sm:$0xff] %v266
    %269 = vst [vmem:[#allocation2 + $0x8] sm:$0xf] %v267
    %v270 = vld [vmem:[#allocation3] sm:$0xff]
    %v271 = vld [vmem:[#allocation3 + $0x8] sm:$0xf]
    %v272 = vld [vmem:[#allocation9] sm:$0xff]
    %v273 = vld [vmem:[#allocation9 + $0x8] sm:$0xff]
    %v274 = vld [vmem:[#allocation9 + $0x10] sm:$0xff]
    %v275 = vld [vmem:[#allocation9 + $0x18] sm:$0xff]
    %v276 = vld [vmem:[#allocation9 + $0x20] sm:$0xff]
    %v277 = vld [vmem:[#allocation9 + $0x28] sm:$0xff]
    %v278 = vld [vmem:[#allocation9 + $0x30] sm:$0xff]
    %v279 = vld [vmem:[#allocation9 + $0x38] sm:$0xff]
    %v280 = vld [vmem:[#allocation9 + $0x40] sm:$0xff]
    %v281 = vld [vmem:[#allocation9 + $0x48] sm:$0xff]
    %v282 = vld [vmem:[#allocation9 + $0x50] sm:$0xff]
    %v283 = vld [vmem:[#allocation9 + $0x58] sm:$0xff]
    %v284 = vrot.slane %v272, 4
    %v285 = vadd.f32 %v272, %v284
    %v286 = vrot.slane %v285, 2
    %v287 = vadd.f32 %v285, %v286
    %v288 = vrot.slane %v287, 1
    %v289 = vadd.f32 %v287, %v288
    %v290 = vrot.slane %v273, 4
    %v291 = vadd.f32 %v273, %v290
    %v292 = vrot.slane %v291, 2
    %v293 = vadd.f32 %v291, %v292
    %v294 = vrot.slane %v293, 1
    %v295 = vadd.f32 %v293, %v294
    %v296 = vrot.slane %v274, 4
    %v297 = vadd.f32 %v274, %v296
    %v298 = vrot.slane %v297, 2
    %v299 = vadd.f32 %v297, %v298
    %v300 = vrot.slane %v299, 1
    %v301 = vadd.f32 %v299, %v300
    %v302 = vrot.slane %v275, 4
    %v303 = vadd.f32 %v275, %v302
    %v304 = vrot.slane %v303, 2
    %v305 = vadd.f32 %v303, %v304
    %v306 = vrot.slane %v305, 1
    %v307 = vadd.f32 %v305, %v306
    %v308 = vrot.slane %v276, 4
    %v309 = vadd.f32 %v276, %v308
    %v310 = vrot.slane %v309, 2
    %v311 = vadd.f32 %v309, %v310
    %v312 = vrot.slane %v311, 1
    %v313 = vadd.f32 %v311, %v312
    %v314 = vrot.slane %v277, 4
    %v315 = vadd.f32 %v277, %v314
    %v316 = vrot.slane %v315, 2
    %v317 = vadd.f32 %v315, %v316
    %v318 = vrot.slane %v317, 1
    %v319 = vadd.f32 %v317, %v318
    %v320 = vrot.slane %v278, 4
    %v321 = vadd.f32 %v278, %v320
    %v322 = vrot.slane %v321, 2
    %v323 = vadd.f32 %v321, %v322
    %v324 = vrot.slane %v323, 1
    %v325 = vadd.f32 %v323, %v324
    %v326 = vrot.slane %v279, 4
    %v327 = vadd.f32 %v279, %v326
    %v328 = vrot.slane %v327, 2
    %v329 = vadd.f32 %v327, %v328
    %v330 = vrot.slane %v329, 1
    %v331 = vadd.f32 %v329, %v330
    %v332 = vrot.slane %v280, 4
    %v333 = vadd.f32 %v280, %v332
    %v334 = vrot.slane %v333, 2
    %v335 = vadd.f32 %v333, %v334
    %v336 = vrot.slane %v335, 1
    %v337 = vadd.f32 %v335, %v336
    %v338 = vrot.slane %v281, 4
    %v339 = vadd.f32 %v281, %v338
    %v340 = vrot.slane %v339, 2
    %v341 = vadd.f32 %v339, %v340
    %v342 = vrot.slane %v341, 1
    %v343 = vadd.f32 %v341, %v342
    %v344 = vrot.slane %v282, 4
    %v345 = vadd.f32 %v282, %v344
    %v346 = vrot.slane %v345, 2
    %v347 = vadd.f32 %v345, %v346
    %v348 = vrot.slane %v347, 1
    %v349 = vadd.f32 %v347, %v348
    %v350 = vrot.slane %v283, 4
    %v351 = vadd.f32 %v283, %v350
    %v352 = vrot.slane %v351, 2
    %v353 = vadd.f32 %v351, %v352
    %v354 = vrot.slane %v353, 1
    %v355 = vadd.f32 %v353, %v354
    %v368 = vcombine.low %v289, %v295
    %v369 = vcombine.low %v301, %v307
    %v371 = vunpack.c.l.s4 1983009808
    %v372 = vunpack.c.0.s8 %v371
    %v373 = vlaneseq
    %v374 = vshrl.u32 %v373, 7
    %v375 = vsub.s32 %v372, %v374
    %v376 = vrot.slane %v368, %v375
    %v378 = vunpack.c.l.s4 1983009808
    %v379 = vunpack.c.0.s8 %v378
    %v380 = vlaneseq
    %v381 = vshrl.u32 %v380, 7
    %v382 = vsub.s32 %v379, %v381
    %v383 = vrot.slane %v369, %v382
    %v384 = vcombine.low %v376, %v383
    %v385 = vcombine.low %v313, %v319
    %v387 = vunpack.c.l.s4 1983009808
    %v388 = vunpack.c.0.s8 %v387
    %v389 = vlaneseq
    %v390 = vshrl.u32 %v389, 7
    %v391 = vsub.s32 %v388, %v390
    %v392 = vrot.slane %v385, %v391
    %v393 = vcombine.low %v325, %v331
    %v394 = vcombine.low %v337, %v343
    %v396 = vunpack.c.l.s4 1983009808
    %v397 = vunpack.c.0.s8 %v396
    %v398 = vlaneseq
    %v399 = vshrl.u32 %v398, 7
    %v400 = vsub.s32 %v397, %v399
    %v401 = vrot.slane %v393, %v400
    %v403 = vunpack.c.l.s4 1983009808
    %v404 = vunpack.c.0.s8 %v403
    %v405 = vlaneseq
    %v406 = vshrl.u32 %v405, 7
    %v407 = vsub.s32 %v404, %v406
    %v408 = vrot.slane %v394, %v407
    %v409 = vcombine.low %v401, %v408
    %v410 = vcombine.low %v349, %v355
    %v412 = vunpack.c.l.s4 1983009808
    %v413 = vunpack.c.0.s8 %v412
    %v414 = vlaneseq
    %v415 = vshrl.u32 %v414, 7
    %v416 = vsub.s32 %v413, %v415
    %v417 = vrot.slane %v410, %v416
    %v418 = vsel %vm244, %v384, %v384
    %v419 = vsel %vm246, %v384, %v418
    %v420 = vrot.slane %v409, 7
    %v421 = vsel %vm249, %v420, %v419
    %v422 = vsel %vm251, %v420, %v421
    %v423 = vsel %vm253, %v420, %v422
    %v424 = vsel %vm255, %v420, %v423
    %v425 = vsel %vm244, %v392, %v392
    %v426 = vsel %vm246, %v392, %v425
    %v427 = vrot.slane %v417, 7
    %v428 = vsel %vm249, %v427, %v426
    %v429 = vsel %vm251, %v427, %v428
    %v430 = vsel %vm253, %v427, %v429
    %v431 = vsel %vm255, %v427, %v430
    %v434 = vadd.f32 %v270, %v424
    %v435 = vadd.f32 %v271, %v431
    %436 = vst [vmem:[#allocation3] sm:$0xff] %v434
    %437 = vst [vmem:[#allocation3 + $0x8] sm:$0xf] %v435
    // Predicated region
    $region50: #{tpu_custom_call.1} parent=1 // pred_check
      %p438 = pneg %p88
    $region51: #{tpu_custom_call.1} parent=1 // pred_check_branch
      %440 = sbr.rel (%p438) target = $region53
    $region52: #{tpu_custom_call.1} parent=1 // pred_region
      %v441 = vld [vmem:[#allocation10] sm:$0xff]
      %v442 = vld [vmem:[#allocation10 + $0x8] sm:$0xff]
      %v443 = vld [vmem:[#allocation10 + $0x10] sm:$0xff]
      %v444 = vld [vmem:[#allocation4] sm:$0xff]
      %v445 = vld [vmem:[#allocation4 + $0x8] sm:$0xf]
      %v448 = vcombine.high %v444, %v444
      %v450 = vunpack.c.l.s4 1983009808
      %v451 = vunpack.c.0.s8 %v450
      %v452 = vlaneseq
      %v453 = vshrl.u32 %v452, 7
      %v454 = vsub.s32 %v451, %v453
      %v455 = vrot.slane %v444, %v454
      %v457 = vunpack.c.l.s4 1983009808
      %v458 = vunpack.c.0.s8 %v457
      %v459 = vlaneseq
      %v460 = vshrl.u32 %v459, 7
      %v461 = vsub.s32 %v458, %v460
      %v462 = vrot.slane %v448, %v461
      %v463 = vcombine.high %v455, %v455
      %v464 = vcombine.high %v462, %v462
      %v466 = vunpack.c.l.s4 1983009808
      %v467 = vunpack.c.0.s8 %v466
      %v468 = vlaneseq
      %v469 = vshrl.u32 %v468, 7
      %v470 = vsub.s32 %v467, %v469
      %v471 = vrot.slane %v445, %v470
      %v472 = vcombine.high %v471, %v471
      %vm479 = vcmask 1041408
      %v480 = vsel %vm479, %v455, 0.0
      %v481 = vsel %vm479, %v463, 0.0
      %v482 = vadd.f32 %v480, %v481
      %v483 = vsel %vm479, %v462, 0.0
      %v484 = vadd.f32 %v482, %v483
      %v485 = vsel %vm479, %v464, 0.0
      %v486 = vadd.f32 %v484, %v485
      %v487 = vsel %vm479, %v471, 0.0
      %v488 = vadd.f32 %v486, %v487
      %v489 = vsel %vm479, %v472, 0.0
      %v490 = vadd.f32 %v488, %v489
      %491 = vadd.xlane.f32.xlu0 %v490
      %v492 = vpop.xlane.xlu0 %491
      %v493 = vrcp.pop 768.0
      %v494 = vmul.f32 %v492, %v493
      %v497 = vunpack.c.l.s4 269488144
      %v498 = vunpack.c.0.s8 %v497
      %v499 = vlaneseq
      %v500 = vshrl.u32 %v499, 7
      %v501 = vsub.s32 %v498, %v500
      %v502 = vrot.slane %v494, %v501
      %v504 = vsub.f32 %v444, %v502
      %v505 = vsub.f32 %v445, %v502
      %v506 = vmul.f32 %v504, %v504
      %v507 = vmul.f32 %v505, %v505
      %v510 = vcombine.high %v506, %v506
      %v512 = vunpack.c.l.s4 1983009808
      %v513 = vunpack.c.0.s8 %v512
      %v514 = vlaneseq
      %v515 = vshrl.u32 %v514, 7
      %v516 = vsub.s32 %v513, %v515
      %v517 = vrot.slane %v506, %v516
      %v519 = vunpack.c.l.s4 1983009808
      %v520 = vunpack.c.0.s8 %v519
      %v521 = vlaneseq
      %v522 = vshrl.u32 %v521, 7
      %v523 = vsub.s32 %v520, %v522
      %v524 = vrot.slane %v510, %v523
      %v525 = vcombine.high %v517, %v517
      %v526 = vcombine.high %v524, %v524
      %v528 = vunpack.c.l.s4 1983009808
      %v529 = vunpack.c.0.s8 %v528
      %v530 = vlaneseq
      %v531 = vshrl.u32 %v530, 7
      %v532 = vsub.s32 %v529, %v531
      %v533 = vrot.slane %v507, %v532
      %v534 = vcombine.high %v533, %v533
      %v541 = vsel %vm479, %v517, 0.0
      %v542 = vsel %vm479, %v525, 0.0
      %v543 = vadd.f32 %v541, %v542
      %v544 = vsel %vm479, %v524, 0.0
      %v545 = vadd.f32 %v543, %v544
      %v546 = vsel %vm479, %v526, 0.0
      %v547 = vadd.f32 %v545, %v546
      %v548 = vsel %vm479, %v533, 0.0
      %v549 = vadd.f32 %v547, %v548
      %v550 = vsel %vm479, %v534, 0.0
      %v551 = vadd.f32 %v549, %v550
      %552 = vadd.xlane.f32.xlu0 %v551
      %v553 = vpop.xlane.xlu0 %552
      %v554 = vmul.f32 %v553, %v493
      %v555 = vadd.f32 %v554, 1e-05
      %v556 = vrsqrt.pop %v555
      %v559 = vunpack.c.l.s4 269488144
      %v560 = vunpack.c.0.s8 %v559
      %v561 = vlaneseq
      %v562 = vshrl.u32 %v561, 7
      %v563 = vsub.s32 %v560, %v562
      %v564 = vrot.slane %v556, %v563
      %v566 = vmul.f32 %v504, %v564
      %v567 = vmul.f32 %v505, %v564
      %v571 = vlaneseq
      %v572 = vshrl.u32 %v571, 7
      %v573 = vsub.s32 0, %v572
      %v574 = vrot.slane %v441, %v573
      %v575 = vlaneseq
      %v576 = vshrl.u32 %v575, 7
      %v577 = vsub.s32 4, %v576
      %v578 = vrot.slane %v441, %v577
      %v579 = vlaneseq
      %v580 = vshrl.u32 %v579, 7
      %v581 = vsub.s32 0, %v580
      %v582 = vrot.slane %v442, %v581
      %v583 = vlaneseq
      %v584 = vshrl.u32 %v583, 7
      %v585 = vsub.s32 4, %v584
      %v586 = vrot.slane %v442, %v585
      %v587 = vlaneseq
      %v588 = vshrl.u32 %v587, 7
      %v589 = vsub.s32 0, %v588
      %v590 = vrot.slane %v443, %v589
      %v591 = vlaneseq
      %v592 = vshrl.u32 %v591, 7
      %v593 = vsub.s32 4, %v592
      %v594 = vrot.slane %v443, %v593
      %v601 = vlaneseq
      %v602 = vshrl.u32 %v601, 7
      %v603 = vsub.s32 0, %v602
      %v604 = vrot.slane %v574, %v603
      %v605 = vlaneseq
      %v606 = vshrl.u32 %v605, 7
      %v607 = vsub.s32 0, %v606
      %v608 = vrot.slane %v578, %v607
      %v609 = vlaneseq
      %v610 = vshrl.u32 %v609, 7
      %v611 = vsub.s32 0, %v610
      %v612 = vrot.slane %v582, %v611
      %v613 = vlaneseq
      %v614 = vshrl.u32 %v613, 7
      %v615 = vsub.s32 0, %v614
      %v616 = vrot.slane %v586, %v615
      %v617 = vlaneseq
      %v618 = vshrl.u32 %v617, 7
      %v619 = vsub.s32 0, %v618
      %v620 = vrot.slane %v590, %v619
      %v621 = vlaneseq
      %v622 = vshrl.u32 %v621, 7
      %v623 = vsub.s32 0, %v622
      %v624 = vrot.slane %v594, %v623
      %v631 = vcombine.low %v604, %v608
      %v632 = vcombine.low %v612, %v616
      %v634 = vunpack.c.l.s4 1983009808
      %v635 = vunpack.c.0.s8 %v634
      %v636 = vlaneseq
      %v637 = vshrl.u32 %v636, 7
      %v638 = vsub.s32 %v635, %v637
      %v639 = vrot.slane %v631, %v638
      %v641 = vunpack.c.l.s4 1983009808
      %v642 = vunpack.c.0.s8 %v641
      %v643 = vlaneseq
      %v644 = vshrl.u32 %v643, 7
      %v645 = vsub.s32 %v642, %v644
      %v646 = vrot.slane %v632, %v645
      %v647 = vcombine.low %v639, %v646
      %v648 = vcombine.low %v620, %v624
      %v650 = vunpack.c.l.s4 1983009808
      %v651 = vunpack.c.0.s8 %v650
      %v652 = vlaneseq
      %v653 = vshrl.u32 %v652, 7
      %v654 = vsub.s32 %v651, %v653
      %v655 = vrot.slane %v648, %v654
      %v658 = vmul.f32 %v566, %v647
      %v659 = vmul.f32 %v567, %v655
      %v660 = vlaneseq
      %v661 = vshrl.u32 %v660, 7
      %v662 = vsub.s32 1, %v661
      %v663 = vrot.slane %v441, %v662
      %v664 = vlaneseq
      %v665 = vshrl.u32 %v664, 7
      %v666 = vsub.s32 5, %v665
      %v667 = vrot.slane %v441, %v666
      %v668 = vlaneseq
      %v669 = vshrl.u32 %v668, 7
      %v670 = vsub.s32 1, %v669
      %v671 = vrot.slane %v442, %v670
      %v672 = vlaneseq
      %v673 = vshrl.u32 %v672, 7
      %v674 = vsub.s32 5, %v673
      %v675 = vrot.slane %v442, %v674
      %v676 = vlaneseq
      %v677 = vshrl.u32 %v676, 7
      %v678 = vsub.s32 1, %v677
      %v679 = vrot.slane %v443, %v678
      %v680 = vlaneseq
      %v681 = vshrl.u32 %v680, 7
      %v682 = vsub.s32 5, %v681
      %v683 = vrot.slane %v443, %v682
      %v690 = vlaneseq
      %v691 = vshrl.u32 %v690, 7
      %v692 = vsub.s32 1, %v691
      %v693 = vrot.slane %v663, %v692
      %v694 = vlaneseq
      %v695 = vshrl.u32 %v694, 7
      %v696 = vsub.s32 1, %v695
      %v697 = vrot.slane %v667, %v696
      %v698 = vlaneseq
      %v699 = vshrl.u32 %v698, 7
      %v700 = vsub.s32 1, %v699
      %v701 = vrot.slane %v671, %v700
      %v702 = vlaneseq
      %v703 = vshrl.u32 %v702, 7
      %v704 = vsub.s32 1, %v703
      %v705 = vrot.slane %v675, %v704
      %v706 = vlaneseq
      %v707 = vshrl.u32 %v706, 7
      %v708 = vsub.s32 1, %v707
      %v709 = vrot.slane %v679, %v708
      %v710 = vlaneseq
      %v711 = vshrl.u32 %v710, 7
      %v712 = vsub.s32 1, %v711
      %v713 = vrot.slane %v683, %v712
      %v720 = vcombine.low %v693, %v697
      %v721 = vcombine.low %v701, %v705
      %v723 = vunpack.c.l.s4 1983009808
      %v724 = vunpack.c.0.s8 %v723
      %v725 = vlaneseq
      %v726 = vshrl.u32 %v725, 7
      %v727 = vsub.s32 %v724, %v726
      %v728 = vrot.slane %v720, %v727
      %v730 = vunpack.c.l.s4 1983009808
      %v731 = vunpack.c.0.s8 %v730
      %v732 = vlaneseq
      %v733 = vshrl.u32 %v732, 7
      %v734 = vsub.s32 %v731, %v733
      %v735 = vrot.slane %v721, %v734
      %v736 = vcombine.low %v728, %v735
      %v737 = vcombine.low %v709, %v713
      %v739 = vunpack.c.l.s4 1983009808
      %v740 = vunpack.c.0.s8 %v739
      %v741 = vlaneseq
      %v742 = vshrl.u32 %v741, 7
      %v743 = vsub.s32 %v740, %v742
      %v744 = vrot.slane %v737, %v743
      %v747 = vadd.f32 %v658, %v736
      %v748 = vadd.f32 %v659, %v744
      %v749 = vld [vmem:[#allocation2] sm:$0xff]
      %v750 = vld [vmem:[#allocation2 + $0x8] sm:$0xf]
      %v751 = vmul.f32 %v749, 0.125
      %v752 = vmul.f32 %v750, 0.125
      %v755 = vcombine.high %v751, %v751
      %v757 = vunpack.c.l.s4 1983009808
      %v758 = vunpack.c.0.s8 %v757
      %v759 = vlaneseq
      %v760 = vshrl.u32 %v759, 7
      %v761 = vsub.s32 %v758, %v760
      %v762 = vrot.slane %v751, %v761
      %v764 = vunpack.c.l.s4 1983009808
      %v765 = vunpack.c.0.s8 %v764
      %v766 = vlaneseq
      %v767 = vshrl.u32 %v766, 7
      %v768 = vsub.s32 %v765, %v767
      %v769 = vrot.slane %v755, %v768
      %v770 = vcombine.high %v762, %v762
      %v771 = vcombine.high %v769, %v769
      %v773 = vunpack.c.l.s4 1983009808
      %v774 = vunpack.c.0.s8 %v773
      %v775 = vlaneseq
      %v776 = vshrl.u32 %v775, 7
      %v777 = vsub.s32 %v774, %v776
      %v778 = vrot.slane %v752, %v777
      %v779 = vcombine.high %v778, %v778
      %v786 = vsel %vm479, %v762, 0.0
      %v787 = vsel %vm479, %v770, 0.0
      %v788 = vadd.f32 %v786, %v787
      %v789 = vsel %vm479, %v769, 0.0
      %v790 = vadd.f32 %v788, %v789
      %v791 = vsel %vm479, %v771, 0.0
      %v792 = vadd.f32 %v790, %v791
      %v793 = vsel %vm479, %v778, 0.0
      %v794 = vadd.f32 %v792, %v793
      %v795 = vsel %vm479, %v779, 0.0
      %v796 = vadd.f32 %v794, %v795
      %797 = vadd.xlane.f32.xlu0 %v796
      %v798 = vpop.xlane.xlu0 %797
      %v799 = vmul.f32 %v798, %v493
      %v802 = vunpack.c.l.s4 269488144
      %v803 = vunpack.c.0.s8 %v802
      %v804 = vlaneseq
      %v805 = vshrl.u32 %v804, 7
      %v806 = vsub.s32 %v803, %v805
      %v807 = vrot.slane %v799, %v806
      %v809 = vsub.f32 %v751, %v807
      %v810 = vsub.f32 %v752, %v807
      %v811 = vmul.f32 %v809, %v809
      %v812 = vmul.f32 %v810, %v810
      %v815 = vcombine.high %v811, %v811
      %v817 = vunpack.c.l.s4 1983009808
      %v818 = vunpack.c.0.s8 %v817
      %v819 = vlaneseq
      %v820 = vshrl.u32 %v819, 7
      %v821 = vsub.s32 %v818, %v820
      %v822 = vrot.slane %v811, %v821
      %v824 = vunpack.c.l.s4 1983009808
      %v825 = vunpack.c.0.s8 %v824
      %v826 = vlaneseq
      %v827 = vshrl.u32 %v826, 7
      %v828 = vsub.s32 %v825, %v827
      %v829 = vrot.slane %v815, %v828
      %v830 = vcombine.high %v822, %v822
      %v831 = vcombine.high %v829, %v829
      %v833 = vunpack.c.l.s4 1983009808
      %v834 = vunpack.c.0.s8 %v833
      %v835 = vlaneseq
      %v836 = vshrl.u32 %v835, 7
      %v837 = vsub.s32 %v834, %v836
      %v838 = vrot.slane %v812, %v837
      %v839 = vcombine.high %v838, %v838
      %v846 = vsel %vm479, %v822, 0.0
      %v847 = vsel %vm479, %v830, 0.0
      %v848 = vadd.f32 %v846, %v847
      %v849 = vsel %vm479, %v829, 0.0
      %v850 = vadd.f32 %v848, %v849
      %v851 = vsel %vm479, %v831, 0.0
      %v852 = vadd.f32 %v850, %v851
      %v853 = vsel %vm479, %v838, 0.0
      %v854 = vadd.f32 %v852, %v853
      %v855 = vsel %vm479, %v839, 0.0
      %v856 = vadd.f32 %v854, %v855
      %857 = vadd.xlane.f32.xlu0 %v856
      %v858 = vpop.xlane.xlu0 %857
      %v859 = vmul.f32 %v858, %v493
      %v860 = vadd.f32 %v859, 1e-05
      %v861 = vrsqrt.pop %v860
      %v864 = vunpack.c.l.s4 269488144
      %v865 = vunpack.c.0.s8 %v864
      %v866 = vlaneseq
      %v867 = vshrl.u32 %v866, 7
      %v868 = vsub.s32 %v865, %v867
      %v869 = vrot.slane %v861, %v868
      %v871 = vmul.f32 %v809, %v869
      %v872 = vmul.f32 %v810, %v869
      %v873 = vlaneseq
      %v874 = vshrl.u32 %v873, 7
      %v875 = vsub.s32 2, %v874
      %v876 = vrot.slane %v441, %v875
      %v877 = vlaneseq
      %v878 = vshrl.u32 %v877, 7
      %v879 = vsub.s32 6, %v878
      %v880 = vrot.slane %v441, %v879
      %v881 = vlaneseq
      %v882 = vshrl.u32 %v881, 7
      %v883 = vsub.s32 2, %v882
      %v884 = vrot.slane %v442, %v883
      %v885 = vlaneseq
      %v886 = vshrl.u32 %v885, 7
      %v887 = vsub.s32 6, %v886
      %v888 = vrot.slane %v442, %v887
      %v889 = vlaneseq
      %v890 = vshrl.u32 %v889, 7
      %v891 = vsub.s32 2, %v890
      %v892 = vrot.slane %v443, %v891
      %v893 = vlaneseq
      %v894 = vshrl.u32 %v893, 7
      %v895 = vsub.s32 6, %v894
      %v896 = vrot.slane %v443, %v895
      %v903 = vlaneseq
      %v904 = vshrl.u32 %v903, 7
      %v905 = vsub.s32 2, %v904
      %v906 = vrot.slane %v876, %v905
      %v907 = vlaneseq
      %v908 = vshrl.u32 %v907, 7
      %v909 = vsub.s32 2, %v908
      %v910 = vrot.slane %v880, %v909
      %v911 = vlaneseq
      %v912 = vshrl.u32 %v911, 7
      %v913 = vsub.s32 2, %v912
      %v914 = vrot.slane %v884, %v913
      %v915 = vlaneseq
      %v916 = vshrl.u32 %v915, 7
      %v917 = vsub.s32 2, %v916
      %v918 = vrot.slane %v888, %v917
      %v919 = vlaneseq
      %v920 = vshrl.u32 %v919, 7
      %v921 = vsub.s32 2, %v920
      %v922 = vrot.slane %v892, %v921
      %v923 = vlaneseq
      %v924 = vshrl.u32 %v923, 7
      %v925 = vsub.s32 2, %v924
      %v926 = vrot.slane %v896, %v925
      %v933 = vcombine.low %v906, %v910
      %v934 = vcombine.low %v914, %v918
      %v936 = vunpack.c.l.s4 1983009808
      %v937 = vunpack.c.0.s8 %v936
      %v938 = vlaneseq
      %v939 = vshrl.u32 %v938, 7
      %v940 = vsub.s32 %v937, %v939
      %v941 = vrot.slane %v933, %v940
      %v943 = vunpack.c.l.s4 1983009808
      %v944 = vunpack.c.0.s8 %v943
      %v945 = vlaneseq
      %v946 = vshrl.u32 %v945, 7
      %v947 = vsub.s32 %v944, %v946
      %v948 = vrot.slane %v934, %v947
      %v949 = vcombine.low %v941, %v948
      %v950 = vcombine.low %v922, %v926
      %v952 = vunpack.c.l.s4 1983009808
      %v953 = vunpack.c.0.s8 %v952
      %v954 = vlaneseq
      %v955 = vshrl.u32 %v954, 7
      %v956 = vsub.s32 %v953, %v955
      %v957 = vrot.slane %v950, %v956
      %v960 = vmul.f32 %v871, %v949
      %v961 = vmul.f32 %v872, %v957
      %v962 = vlaneseq
      %v963 = vshrl.u32 %v962, 7
      %v964 = vsub.s32 3, %v963
      %v965 = vrot.slane %v441, %v964
      %v966 = vlaneseq
      %v967 = vshrl.u32 %v966, 7
      %v968 = vsub.s32 7, %v967
      %v969 = vrot.slane %v441, %v968
      %v970 = vlaneseq
      %v971 = vshrl.u32 %v970, 7
      %v972 = vsub.s32 3, %v971
      %v973 = vrot.slane %v442, %v972
      %v974 = vlaneseq
      %v975 = vshrl.u32 %v974, 7
      %v976 = vsub.s32 7, %v975
      %v977 = vrot.slane %v442, %v976
      %v978 = vlaneseq
      %v979 = vshrl.u32 %v978, 7
      %v980 = vsub.s32 3, %v979
      %v981 = vrot.slane %v443, %v980
      %v982 = vlaneseq
      %v983 = vshrl.u32 %v982, 7
      %v984 = vsub.s32 7, %v983
      %v985 = vrot.slane %v443, %v984
      %v992 = vlaneseq
      %v993 = vshrl.u32 %v992, 7
      %v994 = vsub.s32 3, %v993
      %v995 = vrot.slane %v965, %v994
      %v996 = vlaneseq
      %v997 = vshrl.u32 %v996, 7
      %v998 = vsub.s32 3, %v997
      %v999 = vrot.slane %v969, %v998
      %v1000 = vlaneseq
      %v1001 = vshrl.u32 %v1000, 7
      %v1002 = vsub.s32 3, %v1001
      %v1003 = vrot.slane %v973, %v1002
      %v1004 = vlaneseq
      %v1005 = vshrl.u32 %v1004, 7
      %v1006 = vsub.s32 3, %v1005
      %v1007 = vrot.slane %v977, %v1006
      %v1008 = vlaneseq
      %v1009 = vshrl.u32 %v1008, 7
      %v1010 = vsub.s32 3, %v1009
      %v1011 = vrot.slane %v981, %v1010
      %v1012 = vlaneseq
      %v1013 = vshrl.u32 %v1012, 7
      %v1014 = vsub.s32 3, %v1013
      %v1015 = vrot.slane %v985, %v1014
      %v1022 = vcombine.low %v995, %v999
      %v1023 = vcombine.low %v1003, %v1007
      %v1025 = vunpack.c.l.s4 1983009808
      %v1026 = vunpack.c.0.s8 %v1025
      %v1027 = vlaneseq
      %v1028 = vshrl.u32 %v1027, 7
      %v1029 = vsub.s32 %v1026, %v1028
      %v1030 = vrot.slane %v1022, %v1029
      %v1032 = vunpack.c.l.s4 1983009808
      %v1033 = vunpack.c.0.s8 %v1032
      %v1034 = vlaneseq
      %v1035 = vshrl.u32 %v1034, 7
      %v1036 = vsub.s32 %v1033, %v1035
      %v1037 = vrot.slane %v1023, %v1036
      %v1038 = vcombine.low %v1030, %v1037
      %v1039 = vcombine.low %v1011, %v1015
      %v1041 = vunpack.c.l.s4 1983009808
      %v1042 = vunpack.c.0.s8 %v1041
      %v1043 = vlaneseq
      %v1044 = vshrl.u32 %v1043, 7
      %v1045 = vsub.s32 %v1042, %v1044
      %v1046 = vrot.slane %v1039, %v1045
      %v1049 = vadd.f32 %v960, %v1038
      %v1050 = vadd.f32 %v961, %v1046
      %v1051 = vld [vmem:[#allocation3] sm:$0xff]
      %v1052 = vld [vmem:[#allocation3 + $0x8] sm:$0xf]
      %v1053 = vmul.f32 %v1051, 0.125
      %v1054 = vmul.f32 %v1052, 0.125
      %v1057 = vcombine.high %v1053, %v1053
      %v1059 = vunpack.c.l.s4 1983009808
      %v1060 = vunpack.c.0.s8 %v1059
      %v1061 = vlaneseq
      %v1062 = vshrl.u32 %v1061, 7
      %v1063 = vsub.s32 %v1060, %v1062
      %v1064 = vrot.slane %v1053, %v1063
      %v1066 = vunpack.c.l.s4 1983009808
      %v1067 = vunpack.c.0.s8 %v1066
      %v1068 = vlaneseq
      %v1069 = vshrl.u32 %v1068, 7
      %v1070 = vsub.s32 %v1067, %v1069
      %v1071 = vrot.slane %v1057, %v1070
      %v1072 = vcombine.high %v1064, %v1064
      %v1073 = vcombine.high %v1071, %v1071
      %v1075 = vunpack.c.l.s4 1983009808
      %v1076 = vunpack.c.0.s8 %v1075
      %v1077 = vlaneseq
      %v1078 = vshrl.u32 %v1077, 7
      %v1079 = vsub.s32 %v1076, %v1078
      %v1080 = vrot.slane %v1054, %v1079
      %v1081 = vcombine.high %v1080, %v1080
      %v1088 = vsel %vm479, %v1064, 0.0
      %v1089 = vsel %vm479, %v1072, 0.0
      %v1090 = vadd.f32 %v1088, %v1089
      %v1091 = vsel %vm479, %v1071, 0.0
      %v1092 = vadd.f32 %v1090, %v1091
      %v1093 = vsel %vm479, %v1073, 0.0
      %v1094 = vadd.f32 %v1092, %v1093
      %v1095 = vsel %vm479, %v1080, 0.0
      %v1096 = vadd.f32 %v1094, %v1095
      %v1097 = vsel %vm479, %v1081, 0.0
      %v1098 = vadd.f32 %v1096, %v1097
      %1099 = vadd.xlane.f32.xlu0 %v1098
      %v1100 = vpop.xlane.xlu0 %1099
      %v1101 = vmul.f32 %v1100, %v493
      %v1104 = vunpack.c.l.s4 269488144
      %v1105 = vunpack.c.0.s8 %v1104
      %v1106 = vlaneseq
      %v1107 = vshrl.u32 %v1106, 7
      %v1108 = vsub.s32 %v1105, %v1107
      %v1109 = vrot.slane %v1101, %v1108
      %v1111 = vsub.f32 %v1053, %v1109
      %v1112 = vsub.f32 %v1054, %v1109
      %v1113 = vmul.f32 %v1111, %v1111
      %v1114 = vmul.f32 %v1112, %v1112
      %v1117 = vcombine.high %v1113, %v1113
      %v1119 = vunpack.c.l.s4 1983009808
      %v1120 = vunpack.c.0.s8 %v1119
      %v1121 = vlaneseq
      %v1122 = vshrl.u32 %v1121, 7
      %v1123 = vsub.s32 %v1120, %v1122
      %v1124 = vrot.slane %v1113, %v1123
      %v1126 = vunpack.c.l.s4 1983009808
      %v1127 = vunpack.c.0.s8 %v1126
      %v1128 = vlaneseq
      %v1129 = vshrl.u32 %v1128, 7
      %v1130 = vsub.s32 %v1127, %v1129
      %v1131 = vrot.slane %v1117, %v1130
      %v1132 = vcombine.high %v1124, %v1124
      %v1133 = vcombine.high %v1131, %v1131
      %v1135 = vunpack.c.l.s4 1983009808
      %v1136 = vunpack.c.0.s8 %v1135
      %v1137 = vlaneseq
      %v1138 = vshrl.u32 %v1137, 7
      %v1139 = vsub.s32 %v1136, %v1138
      %v1140 = vrot.slane %v1114, %v1139
      %v1141 = vcombine.high %v1140, %v1140
      %v1148 = vsel %vm479, %v1124, 0.0
      %v1149 = vsel %vm479, %v1132, 0.0
      %v1150 = vadd.f32 %v1148, %v1149
      %v1151 = vsel %vm479, %v1131, 0.0
      %v1152 = vadd.f32 %v1150, %v1151
      %v1153 = vsel %vm479, %v1133, 0.0
      %v1154 = vadd.f32 %v1152, %v1153
      %v1155 = vsel %vm479, %v1140, 0.0
      %v1156 = vadd.f32 %v1154, %v1155
      %v1157 = vsel %vm479, %v1141, 0.0
      %v1158 = vadd.f32 %v1156, %v1157
      %1159 = vadd.xlane.f32.xlu0 %v1158
      %v1160 = vpop.xlane.xlu0 %1159
      %v1161 = vmul.f32 %v1160, %v493
      %v1162 = vadd.f32 %v1161, 1e-05
      %v1163 = vrsqrt.pop %v1162
      %v1166 = vunpack.c.l.s4 269488144
      %v1167 = vunpack.c.0.s8 %v1166
      %v1168 = vlaneseq
      %v1169 = vshrl.u32 %v1168, 7
      %v1170 = vsub.s32 %v1167, %v1169
      %v1171 = vrot.slane %v1163, %v1170
      %v1173 = vmul.f32 %v1111, %v1171
      %v1174 = vmul.f32 %v1112, %v1171
      %v1175 = vmul.f32 %v1173, %v949
      %v1176 = vmul.f32 %v1174, %v957
      %v1177 = vadd.f32 %v1175, %v1038
      %v1178 = vadd.f32 %v1176, %v1046
      %v1179 = vmul.f32 %v1049, 0.6
      %v1180 = vmul.f32 %v1050, 0.6
      %v1181 = vmul.f32 %v1177, 0.4
      %v1182 = vmul.f32 %v1178, 0.4
      %v1183 = vadd.f32 %v1179, %v1181
      %v1184 = vadd.f32 %v1180, %v1182
      %v1185 = vmul.f32 %v1183, 0.5
      %v1186 = vmul.f32 %v1184, 0.5
      %v1187 = vld [vmem:[#allocation12] sm:$0xff]
      %v1188 = vld [vmem:[#allocation12 + $0x8] sm:$0xff]
      %v1189 = vld [vmem:[#allocation12 + $0x10] sm:$0xff]
      %v1190 = vld [vmem:[#allocation12 + $0x18] sm:$0xff]
      %v1191 = vld [vmem:[#allocation12 + $0x20] sm:$0xff]
      %v1192 = vld [vmem:[#allocation12 + $0x28] sm:$0xff]
      %v1193 = vld [vmem:[#allocation12 + $0x30] sm:$0xff]
      %v1194 = vld [vmem:[#allocation12 + $0x38] sm:$0xff]
      %v1195 = vld [vmem:[#allocation12 + $0x40] sm:$0xff]
      %v1196 = vld [vmem:[#allocation12 + $0x48] sm:$0xff]
      %v1197 = vld [vmem:[#allocation12 + $0x50] sm:$0xff]
      %v1198 = vld [vmem:[#allocation12 + $0x58] sm:$0xff]
      %v1199 = vld [vmem:[#allocation12 + $0x60] sm:$0xff]
      %v1200 = vld [vmem:[#allocation12 + $0x68] sm:$0xff]
      %v1201 = vld [vmem:[#allocation12 + $0x70] sm:$0xff]
      %v1202 = vld [vmem:[#allocation12 + $0x78] sm:$0xff]
      %v1203 = vld [vmem:[#allocation12 + $0x80] sm:$0xff]
      %v1204 = vld [vmem:[#allocation12 + $0x88] sm:$0xff]
      %v1205 = vld [vmem:[#allocation12 + $0x90] sm:$0xff]
      %v1206 = vld [vmem:[#allocation12 + $0x98] sm:$0xff]
      %v1207 = vld [vmem:[#allocation12 + $0xa0] sm:$0xff]
      %v1208 = vld [vmem:[#allocation12 + $0xa8] sm:$0xff]
      %v1209 = vld [vmem:[#allocation12 + $0xb0] sm:$0xff]
      %v1210 = vld [vmem:[#allocation12 + $0xb8] sm:$0xff]
      %v1211 = vld [vmem:[#allocation12 + $0xc0] sm:$0xff]
      %v1212 = vld [vmem:[#allocation12 + $0xc8] sm:$0xff]
      %v1213 = vld [vmem:[#allocation12 + $0xd0] sm:$0xff]
      %v1214 = vld [vmem:[#allocation12 + $0xd8] sm:$0xff]
      %v1215 = vld [vmem:[#allocation12 + $0xe0] sm:$0xff]
      %v1216 = vld [vmem:[#allocation12 + $0xe8] sm:$0xff]
      %v1217 = vld [vmem:[#allocation12 + $0xf0] sm:$0xff]
      %v1218 = vld [vmem:[#allocation12 + $0xf8] sm:$0xff]
      %v1219 = vld [vmem:[#allocation12 + $0x100] sm:$0xff]
      %v1220 = vld [vmem:[#allocation12 + $0x108] sm:$0xff]
      %v1221 = vld [vmem:[#allocation12 + $0x110] sm:$0xff]
      %v1222 = vld [vmem:[#allocation12 + $0x118] sm:$0xff]
      %v1223 = vld [vmem:[#allocation12 + $0x120] sm:$0xff]
      %v1224 = vld [vmem:[#allocation12 + $0x128] sm:$0xff]
      %v1225 = vld [vmem:[#allocation12 + $0x130] sm:$0xff]
      %v1226 = vld [vmem:[#allocation12 + $0x138] sm:$0xff]
      %v1227 = vld [vmem:[#allocation12 + $0x140] sm:$0xff]
      %v1228 = vld [vmem:[#allocation12 + $0x148] sm:$0xff]
      %v1229 = vld [vmem:[#allocation12 + $0x150] sm:$0xff]
      %v1230 = vld [vmem:[#allocation12 + $0x158] sm:$0xff]
      %v1231 = vld [vmem:[#allocation12 + $0x160] sm:$0xff]
      %v1232 = vld [vmem:[#allocation12 + $0x168] sm:$0xff]
      %v1233 = vld [vmem:[#allocation12 + $0x170] sm:$0xff]
      %v1234 = vld [vmem:[#allocation12 + $0x178] sm:$0xff]
      %v1235 = vld [vmem:[#allocation12 + $0x180] sm:$0xff]
      %v1236 = vld [vmem:[#allocation12 + $0x188] sm:$0xff]
      %v1237 = vld [vmem:[#allocation12 + $0x190] sm:$0xff]
      %v1238 = vld [vmem:[#allocation12 + $0x198] sm:$0xff]
      %v1239 = vld [vmem:[#allocation12 + $0x1a0] sm:$0xff]
      %v1240 = vld [vmem:[#allocation12 + $0x1a8] sm:$0xff]
      %v1241 = vld [vmem:[#allocation12 + $0x1b0] sm:$0xff]
      %v1242 = vld [vmem:[#allocation12 + $0x1b8] sm:$0xff]
      %v1243 = vld [vmem:[#allocation12 + $0x1c0] sm:$0xff]
      %v1244 = vld [vmem:[#allocation12 + $0x1c8] sm:$0xff]
      %v1245 = vld [vmem:[#allocation12 + $0x1d0] sm:$0xff]
      %v1246 = vld [vmem:[#allocation12 + $0x1d8] sm:$0xff]
      %v1247 = vld [vmem:[#allocation12 + $0x1e0] sm:$0xff]
      %v1248 = vld [vmem:[#allocation12 + $0x1e8] sm:$0xff]
      %v1249 = vld [vmem:[#allocation12 + $0x1f0] sm:$0xff]
      %v1250 = vld [vmem:[#allocation12 + $0x1f8] sm:$0xff]
      %v1251 = vld [vmem:[#allocation12 + $0x200] sm:$0xff]
      %v1252 = vld [vmem:[#allocation12 + $0x208] sm:$0xff]
      %v1253 = vld [vmem:[#allocation12 + $0x210] sm:$0xff]
      %v1254 = vld [vmem:[#allocation12 + $0x218] sm:$0xff]
      %v1255 = vld [vmem:[#allocation12 + $0x220] sm:$0xff]
      %v1256 = vld [vmem:[#allocation12 + $0x228] sm:$0xff]
      %v1257 = vld [vmem:[#allocation12 + $0x230] sm:$0xff]
      %v1258 = vld [vmem:[#allocation12 + $0x238] sm:$0xff]
      %v1259 = vld [vmem:[#allocation12 + $0x240] sm:$0xff]
      %v1260 = vld [vmem:[#allocation12 + $0x248] sm:$0xff]
      %v1261 = vld [vmem:[#allocation12 + $0x250] sm:$0xff]
      %v1262 = vld [vmem:[#allocation12 + $0x258] sm:$0xff]
      %v1263 = vld [vmem:[#allocation12 + $0x260] sm:$0xff]
      %v1264 = vld [vmem:[#allocation12 + $0x268] sm:$0xff]
      %v1265 = vld [vmem:[#allocation12 + $0x270] sm:$0xff]
      %v1266 = vld [vmem:[#allocation12 + $0x278] sm:$0xff]
      %v1267 = vld [vmem:[#allocation12 + $0x280] sm:$0xff]
      %v1268 = vld [vmem:[#allocation12 + $0x288] sm:$0xff]
      %v1269 = vld [vmem:[#allocation12 + $0x290] sm:$0xff]
      %v1270 = vld [vmem:[#allocation12 + $0x298] sm:$0xff]
      %v1271 = vld [vmem:[#allocation12 + $0x2a0] sm:$0xff]
      %v1272 = vld [vmem:[#allocation12 + $0x2a8] sm:$0xff]
      %v1273 = vld [vmem:[#allocation12 + $0x2b0] sm:$0xff]
      %v1274 = vld [vmem:[#allocation12 + $0x2b8] sm:$0xff]
      %v1275 = vld [vmem:[#allocation12 + $0x2c0] sm:$0xff]
      %v1276 = vld [vmem:[#allocation12 + $0x2c8] sm:$0xff]
      %v1277 = vld [vmem:[#allocation12 + $0x2d0] sm:$0xff]
      %v1278 = vld [vmem:[#allocation12 + $0x2d8] sm:$0xff]
      %v1279 = vld [vmem:[#allocation12 + $0x2e0] sm:$0xff]
      %v1280 = vld [vmem:[#allocation12 + $0x2e8] sm:$0xff]
      %v1281 = vld [vmem:[#allocation12 + $0x2f0] sm:$0xff]
      %v1282 = vld [vmem:[#allocation12 + $0x2f8] sm:$0xff]
      %v1283 = vld [vmem:[#allocation12 + $0x300] sm:$0xff]
      %v1284 = vld [vmem:[#allocation12 + $0x308] sm:$0xff]
      %v1285 = vld [vmem:[#allocation12 + $0x310] sm:$0xff]
      %v1286 = vld [vmem:[#allocation12 + $0x318] sm:$0xff]
      %v1287 = vld [vmem:[#allocation12 + $0x320] sm:$0xff]
      %v1288 = vld [vmem:[#allocation12 + $0x328] sm:$0xff]
      %v1289 = vld [vmem:[#allocation12 + $0x330] sm:$0xff]
      %v1290 = vld [vmem:[#allocation12 + $0x338] sm:$0xff]
      %v1291 = vld [vmem:[#allocation12 + $0x340] sm:$0xff]
      %v1292 = vld [vmem:[#allocation12 + $0x348] sm:$0xff]
      %v1293 = vld [vmem:[#allocation12 + $0x350] sm:$0xff]
      %v1294 = vld [vmem:[#allocation12 + $0x358] sm:$0xff]
      %v1295 = vld [vmem:[#allocation12 + $0x360] sm:$0xff]
      %v1296 = vld [vmem:[#allocation12 + $0x368] sm:$0xff]
      %v1297 = vld [vmem:[#allocation12 + $0x370] sm:$0xff]
      %v1298 = vld [vmem:[#allocation12 + $0x378] sm:$0xff]
      %v1299 = vld [vmem:[#allocation12 + $0x380] sm:$0xff]
      %v1300 = vld [vmem:[#allocation12 + $0x388] sm:$0xff]
      %v1301 = vld [vmem:[#allocation12 + $0x390] sm:$0xff]
      %v1302 = vld [vmem:[#allocation12 + $0x398] sm:$0xff]
      %v1303 = vld [vmem:[#allocation12 + $0x3a0] sm:$0xff]
      %v1304 = vld [vmem:[#allocation12 + $0x3a8] sm:$0xff]
      %v1305 = vld [vmem:[#allocation12 + $0x3b0] sm:$0xff]
      %v1306 = vld [vmem:[#allocation12 + $0x3b8] sm:$0xff]
      %v1307 = vld [vmem:[#allocation12 + $0x3c0] sm:$0xff]
      %v1308 = vld [vmem:[#allocation12 + $0x3c8] sm:$0xff]
      %v1309 = vld [vmem:[#allocation12 + $0x3d0] sm:$0xff]
      %v1310 = vld [vmem:[#allocation12 + $0x3d8] sm:$0xff]
      %v1311 = vld [vmem:[#allocation12 + $0x3e0] sm:$0xff]
      %v1312 = vld [vmem:[#allocation12 + $0x3e8] sm:$0xff]
      %v1313 = vld [vmem:[#allocation12 + $0x3f0] sm:$0xff]
      %v1314 = vld [vmem:[#allocation12 + $0x3f8] sm:$0xff]
      %v1315 = vld [vmem:[#allocation12 + $0x400] sm:$0xff]
      %v1316 = vld [vmem:[#allocation12 + $0x408] sm:$0xff]
      %v1317 = vld [vmem:[#allocation12 + $0x410] sm:$0xff]
      %v1318 = vld [vmem:[#allocation12 + $0x418] sm:$0xff]
      %v1319 = vld [vmem:[#allocation12 + $0x420] sm:$0xff]
      %v1320 = vld [vmem:[#allocation12 + $0x428] sm:$0xff]
      %v1321 = vld [vmem:[#allocation12 + $0x430] sm:$0xff]
      %v1322 = vld [vmem:[#allocation12 + $0x438] sm:$0xff]
      %v1323 = vld [vmem:[#allocation12 + $0x440] sm:$0xff]
      %v1324 = vld [vmem:[#allocation12 + $0x448] sm:$0xff]
      %v1325 = vld [vmem:[#allocation12 + $0x450] sm:$0xff]
      %v1326 = vld [vmem:[#allocation12 + $0x458] sm:$0xff]
      %v1327 = vld [vmem:[#allocation12 + $0x460] sm:$0xff]
      %v1328 = vld [vmem:[#allocation12 + $0x468] sm:$0xff]
      %v1329 = vld [vmem:[#allocation12 + $0x470] sm:$0xff]
      %v1330 = vld [vmem:[#allocation12 + $0x478] sm:$0xff]
      %v1331 = vld [vmem:[#allocation12 + $0x480] sm:$0xff]
      %v1332 = vld [vmem:[#allocation12 + $0x488] sm:$0xff]
      %v1333 = vld [vmem:[#allocation12 + $0x490] sm:$0xff]
      %v1334 = vld [vmem:[#allocation12 + $0x498] sm:$0xff]
      %v1335 = vld [vmem:[#allocation12 + $0x4a0] sm:$0xff]
      %v1336 = vld [vmem:[#allocation12 + $0x4a8] sm:$0xff]
      %v1337 = vld [vmem:[#allocation12 + $0x4b0] sm:$0xff]
      %v1338 = vld [vmem:[#allocation12 + $0x4b8] sm:$0xff]
      %v1339 = vld [vmem:[#allocation12 + $0x4c0] sm:$0xff]
      %v1340 = vld [vmem:[#allocation12 + $0x4c8] sm:$0xff]
      %v1341 = vld [vmem:[#allocation12 + $0x4d0] sm:$0xff]
      %v1342 = vld [vmem:[#allocation12 + $0x4d8] sm:$0xff]
      %v1343 = vld [vmem:[#allocation12 + $0x4e0] sm:$0xff]
      %v1344 = vld [vmem:[#allocation12 + $0x4e8] sm:$0xff]
      %v1345 = vld [vmem:[#allocation12 + $0x4f0] sm:$0xff]
      %v1346 = vld [vmem:[#allocation12 + $0x4f8] sm:$0xff]
      %v1347 = vld [vmem:[#allocation12 + $0x500] sm:$0xff]
      %v1348 = vld [vmem:[#allocation12 + $0x508] sm:$0xff]
      %v1349 = vld [vmem:[#allocation12 + $0x510] sm:$0xff]
      %v1350 = vld [vmem:[#allocation12 + $0x518] sm:$0xff]
      %v1351 = vld [vmem:[#allocation12 + $0x520] sm:$0xff]
      %v1352 = vld [vmem:[#allocation12 + $0x528] sm:$0xff]
      %v1353 = vld [vmem:[#allocation12 + $0x530] sm:$0xff]
      %v1354 = vld [vmem:[#allocation12 + $0x538] sm:$0xff]
      %v1355 = vld [vmem:[#allocation12 + $0x540] sm:$0xff]
      %v1356 = vld [vmem:[#allocation12 + $0x548] sm:$0xff]
      %v1357 = vld [vmem:[#allocation12 + $0x550] sm:$0xff]
      %v1358 = vld [vmem:[#allocation12 + $0x558] sm:$0xff]
      %v1359 = vld [vmem:[#allocation12 + $0x560] sm:$0xff]
      %v1360 = vld [vmem:[#allocation12 + $0x568] sm:$0xff]
      %v1361 = vld [vmem:[#allocation12 + $0x570] sm:$0xff]
      %v1362 = vld [vmem:[#allocation12 + $0x578] sm:$0xff]
      %v1363 = vld [vmem:[#allocation12 + $0x580] sm:$0xff]
      %v1364 = vld [vmem:[#allocation12 + $0x588] sm:$0xff]
      %v1365 = vld [vmem:[#allocation12 + $0x590] sm:$0xff]
      %v1366 = vld [vmem:[#allocation12 + $0x598] sm:$0xff]
      %v1367 = vld [vmem:[#allocation12 + $0x5a0] sm:$0xff]
      %v1368 = vld [vmem:[#allocation12 + $0x5a8] sm:$0xff]
      %v1369 = vld [vmem:[#allocation12 + $0x5b0] sm:$0xff]
      %v1370 = vld [vmem:[#allocation12 + $0x5b8] sm:$0xff]
      %v1371 = vld [vmem:[#allocation12 + $0x5c0] sm:$0xff]
      %v1372 = vld [vmem:[#allocation12 + $0x5c8] sm:$0xff]
      %v1373 = vld [vmem:[#allocation12 + $0x5d0] sm:$0xff]
      %v1374 = vld [vmem:[#allocation12 + $0x5d8] sm:$0xff]
      %v1375 = vld [vmem:[#allocation12 + $0x5e0] sm:$0xff]
      %v1376 = vld [vmem:[#allocation12 + $0x5e8] sm:$0xff]
      %v1377 = vld [vmem:[#allocation12 + $0x5f0] sm:$0xff]
      %v1378 = vld [vmem:[#allocation12 + $0x5f8] sm:$0xff]
      %v1381 = vcombine.high %v1185, %v1185
      %v1383 = vunpack.c.l.s4 1983009808
      %v1384 = vunpack.c.0.s8 %v1383
      %v1385 = vlaneseq
      %v1386 = vshrl.u32 %v1385, 7
      %v1387 = vsub.s32 %v1384, %v1386
      %v1388 = vrot.slane %v1185, %v1387
      %v1390 = vunpack.c.l.s4 1983009808
      %v1391 = vunpack.c.0.s8 %v1390
      %v1392 = vlaneseq
      %v1393 = vshrl.u32 %v1392, 7
      %v1394 = vsub.s32 %v1391, %v1393
      %v1395 = vrot.slane %v1381, %v1394
      %v1396 = vcombine.high %v1388, %v1388
      %v1397 = vcombine.high %v1395, %v1395
      %v1399 = vunpack.c.l.s4 1983009808
      %v1400 = vunpack.c.0.s8 %v1399
      %v1401 = vlaneseq
      %v1402 = vshrl.u32 %v1401, 7
      %v1403 = vsub.s32 %v1400, %v1402
      %v1404 = vrot.slane %v1186, %v1403
      %v1405 = vcombine.high %v1404, %v1404
      %1412 = vmatprep.subr.mxu0 0.0
      %1413 = vmatpush1.msra.mxu0 %v1283
      %1414 = vmatprep.subr.mxu0 0.0
      %1415 = vmatpush1.msra.mxu0 %v1284
      %1416 = vmatprep.subr.mxu0 0.0
      %1417 = vmatpush1.msra.mxu0 %v1285
      %1418 = vmatprep.subr.mxu0 0.0
      %1419 = vmatpush1.msra.mxu0 %v1286
      %1420 = vmatprep.subr.mxu0 0.0
      %1421 = vmatpush1.msra.mxu0 %v1287
      %1422 = vmatprep.subr.mxu0 0.0
      %1423 = vmatpush1.msra.mxu0 %v1288
      %1424 = vmatprep.subr.mxu0 0.0
      %1425 = vmatpush1.msra.mxu0 %v1289
      %1426 = vmatprep.subr.mxu0 0.0
      %1427 = vmatpush1.msra.mxu0 %v1290
      %1428 = vmatprep.subr.mxu0 0.0
      %1429 = vmatpush1.msra.mxu0 %v1291
      %1430 = vmatprep.subr.mxu0 0.0
      %1431 = vmatpush1.msra.mxu0 %v1292
      %1432 = vmatprep.subr.mxu0 0.0
      %1433 = vmatpush1.msra.mxu0 %v1293
      %1434 = vmatprep.subr.mxu0 0.0
      %1435 = vmatpush1.msra.mxu0 %v1294
      %1436 = vmatprep.subr.mxu0 0.0
      %1437 = vmatpush1.msra.mxu0 %v1295
      %1438 = vmatprep.subr.mxu0 0.0
      %1439 = vmatpush1.msra.mxu0 %v1296
      %1440 = vmatprep.subr.mxu0 0.0
      %1441 = vmatpush1.msra.mxu0 %v1297
      %1442 = vmatprep.subr.mxu0 0.0
      %1443 = vmatpush1.msra.mxu0 %v1298
      %1444 = vmatprep.subr.mxu0 0.0
      %1445 = vmatpush1.msra.mxu0 %v1299
      %1446 = vmatprep.subr.mxu0 0.0
      %1447 = vmatpush1.msra.mxu0 %v1300
      %1448 = vmatprep.subr.mxu0 0.0
      %1449 = vmatpush1.msra.mxu0 %v1301
      %1450 = vmatprep.subr.mxu0 0.0
      %1451 = vmatpush1.msra.mxu0 %v1302
      %1452 = vmatprep.subr.mxu0 0.0
      %1453 = vmatpush1.msra.mxu0 %v1303
      %1454 = vmatprep.subr.mxu0 0.0
      %1455 = vmatpush1.msra.mxu0 %v1304
      %1456 = vmatprep.subr.mxu0 0.0
      %1457 = vmatpush1.msra.mxu0 %v1305
      %1458 = vmatprep.subr.mxu0 0.0
      %1459 = vmatpush1.msra.mxu0 %v1306
      %1460 = vmatprep.subr.mxu0 0.0
      %1461 = vmatpush1.msra.mxu0 %v1307
      %1462 = vmatprep.subr.mxu0 0.0
      %1463 = vmatpush1.msra.mxu0 %v1308
      %1464 = vmatprep.subr.mxu0 0.0
      %1465 = vmatpush1.msra.mxu0 %v1309
      %1466 = vmatprep.subr.mxu0 0.0
      %1467 = vmatpush1.msra.mxu0 %v1310
      %1468 = vmatprep.subr.mxu0 0.0
      %1469 = vmatpush1.msra.mxu0 %v1311
      %1470 = vmatprep.subr.mxu0 0.0
      %1471 = vmatpush1.msra.mxu0 %v1312
      %1472 = vmatprep.subr.mxu0 0.0
      %1473 = vmatpush1.msra.mxu0 %v1313
      %1474 = vmatprep.subr.mxu0 0.0
      %1475 = vmatpush1.msra.mxu0 %v1314
      %1476 = vmatprep.mubr.f32.mxu0 %v1396
      %1477 = vmatmul.mubr.f32.gmra.mrb[0].mxu0 %v1388
      %v1478 = vpop.f32.mrb[0].mxu0
      %v1479 = vadd.f32 0.0, %v1478
      %v1480 = vpop.f32.mrb[0].mxu0
      %1481 = vdwg.mxu0
      %1482 = vmatprep.subr.mxu0 0.0
      %1483 = vmatpush1.msra.mxu0 %v1315
      %1484 = vmatprep.subr.mxu0 0.0
      %1485 = vmatpush1.msra.mxu0 %v1316
      %1486 = vmatprep.subr.mxu0 0.0
      %1487 = vmatpush1.msra.mxu0 %v1317
      %1488 = vmatprep.subr.mxu0 0.0
      %1489 = vmatpush1.msra.mxu0 %v1318
      %1490 = vmatprep.subr.mxu0 0.0
      %1491 = vmatpush1.msra.mxu0 %v1319
      %1492 = vmatprep.subr.mxu0 0.0
      %1493 = vmatpush1.msra.mxu0 %v1320
      %1494 = vmatprep.subr.mxu0 0.0
      %1495 = vmatpush1.msra.mxu0 %v1321
      %1496 = vmatprep.subr.mxu0 0.0
      %1497 = vmatpush1.msra.mxu0 %v1322
      %1498 = vmatprep.subr.mxu0 0.0
      %1499 = vmatpush1.msra.mxu0 %v1323
      %1500 = vmatprep.subr.mxu0 0.0
      %1501 = vmatpush1.msra.mxu0 %v1324
      %1502 = vmatprep.subr.mxu0 0.0
      %1503 = vmatpush1.msra.mxu0 %v1325
      %1504 = vmatprep.subr.mxu0 0.0
      %1505 = vmatpush1.msra.mxu0 %v1326
      %1506 = vmatprep.subr.mxu0 0.0
      %1507 = vmatpush1.msra.mxu0 %v1327
      %1508 = vmatprep.subr.mxu0 0.0
      %1509 = vmatpush1.msra.mxu0 %v1328
      %1510 = vmatprep.subr.mxu0 0.0
      %1511 = vmatpush1.msra.mxu0 %v1329
      %1512 = vmatprep.subr.mxu0 0.0
      %1513 = vmatpush1.msra.mxu0 %v1330
      %1514 = vmatprep.subr.mxu0 0.0
      %1515 = vmatpush1.msra.mxu0 %v1331
      %1516 = vmatprep.subr.mxu0 0.0
      %1517 = vmatpush1.msra.mxu0 %v1332
      %1518 = vmatprep.subr.mxu0 0.0
      %1519 = vmatpush1.msra.mxu0 %v1333
      %1520 = vmatprep.subr.mxu0 0.0
      %1521 = vmatpush1.msra.mxu0 %v1334
      %1522 = vmatprep.subr.mxu0 0.0
      %1523 = vmatpush1.msra.mxu0 %v1335
      %1524 = vmatprep.subr.mxu0 0.0
      %1525 = vmatpush1.msra.mxu0 %v1336
      %1526 = vmatprep.subr.mxu0 0.0
      %1527 = vmatpush1.msra.mxu0 %v1337
      %1528 = vmatprep.subr.mxu0 0.0
      %1529 = vmatpush1.msra.mxu0 %v1338
      %1530 = vmatprep.subr.mxu0 0.0
      %1531 = vmatpush1.msra.mxu0 %v1339
      %1532 = vmatprep.subr.mxu0 0.0
      %1533 = vmatpush1.msra.mxu0 %v1340
      %1534 = vmatprep.subr.mxu0 0.0
      %1535 = vmatpush1.msra.mxu0 %v1341
      %1536 = vmatprep.subr.mxu0 0.0
      %1537 = vmatpush1.msra.mxu0 %v1342
      %1538 = vmatprep.subr.mxu0 0.0
      %1539 = vmatpush1.msra.mxu0 %v1343
      %1540 = vmatprep.subr.mxu0 0.0
      %1541 = vmatpush1.msra.mxu0 %v1344
      %1542 = vmatprep.subr.mxu0 0.0
      %1543 = vmatpush1.msra.mxu0 %v1345
      %1544 = vmatprep.subr.mxu0 0.0
      %1545 = vmatpush1.msra.mxu0 %v1346
      %1546 = vmatprep.mubr.f32.mxu0 %v1397
      %1547 = vmatmul.mubr.f32.gmra.mrb[0].mxu0 %v1395
      %v1548 = vpop.f32.mrb[0].mxu0
      %v1549 = vadd.f32 %v1479, %v1548
      %v1550 = vpop.f32.mrb[0].mxu0
      %1551 = vdwg.mxu0
      %1552 = vmatprep.subr.mxu0 0.0
      %1553 = vmatpush1.msra.mxu0 %v1347
      %1554 = vmatprep.subr.mxu0 0.0
      %1555 = vmatpush1.msra.mxu0 %v1348
      %1556 = vmatprep.subr.mxu0 0.0
      %1557 = vmatpush1.msra.mxu0 %v1349
      %1558 = vmatprep.subr.mxu0 0.0
      %1559 = vmatpush1.msra.mxu0 %v1350
      %1560 = vmatprep.subr.mxu0 0.0
      %1561 = vmatpush1.msra.mxu0 %v1351
      %1562 = vmatprep.subr.mxu0 0.0
      %1563 = vmatpush1.msra.mxu0 %v1352
      %1564 = vmatprep.subr.mxu0 0.0
      %1565 = vmatpush1.msra.mxu0 %v1353
      %1566 = vmatprep.subr.mxu0 0.0
      %1567 = vmatpush1.msra.mxu0 %v1354
      %1568 = vmatprep.subr.mxu0 0.0
      %1569 = vmatpush1.msra.mxu0 %v1355
      %1570 = vmatprep.subr.mxu0 0.0
      %1571 = vmatpush1.msra.mxu0 %v1356
      %1572 = vmatprep.subr.mxu0 0.0
      %1573 = vmatpush1.msra.mxu0 %v1357
      %1574 = vmatprep.subr.mxu0 0.0
      %1575 = vmatpush1.msra.mxu0 %v1358
      %1576 = vmatprep.subr.mxu0 0.0
      %1577 = vmatpush1.msra.mxu0 %v1359
      %1578 = vmatprep.subr.mxu0 0.0
      %1579 = vmatpush1.msra.mxu0 %v1360
      %1580 = vmatprep.subr.mxu0 0.0
      %1581 = vmatpush1.msra.mxu0 %v1361
      %1582 = vmatprep.subr.mxu0 0.0
      %1583 = vmatpush1.msra.mxu0 %v1362
      %1584 = vmatprep.subr.mxu0 0.0
      %1585 = vmatpush1.msra.mxu0 %v1363
      %1586 = vmatprep.subr.mxu0 0.0
      %1587 = vmatpush1.msra.mxu0 %v1364
      %1588 = vmatprep.subr.mxu0 0.0
      %1589 = vmatpush1.msra.mxu0 %v1365
      %1590 = vmatprep.subr.mxu0 0.0
      %1591 = vmatpush1.msra.mxu0 %v1366
      %1592 = vmatprep.subr.mxu0 0.0
      %1593 = vmatpush1.msra.mxu0 %v1367
      %1594 = vmatprep.subr.mxu0 0.0
      %1595 = vmatpush1.msra.mxu0 %v1368
      %1596 = vmatprep.subr.mxu0 0.0
      %1597 = vmatpush1.msra.mxu0 %v1369
      %1598 = vmatprep.subr.mxu0 0.0
      %1599 = vmatpush1.msra.mxu0 %v1370
      %1600 = vmatprep.subr.mxu0 0.0
      %1601 = vmatpush1.msra.mxu0 %v1371
      %1602 = vmatprep.subr.mxu0 0.0
      %1603 = vmatpush1.msra.mxu0 %v1372
      %1604 = vmatprep.subr.mxu0 0.0
      %1605 = vmatpush1.msra.mxu0 %v1373
      %1606 = vmatprep.subr.mxu0 0.0
      %1607 = vmatpush1.msra.mxu0 %v1374
      %1608 = vmatprep.subr.mxu0 0.0
      %1609 = vmatpush1.msra.mxu0 %v1375
      %1610 = vmatprep.subr.mxu0 0.0
      %1611 = vmatpush1.msra.mxu0 %v1376
      %1612 = vmatprep.subr.mxu0 0.0
      %1613 = vmatpush1.msra.mxu0 %v1377
      %1614 = vmatprep.subr.mxu0 0.0
      %1615 = vmatpush1.msra.mxu0 %v1378
      %1616 = vmatprep.mubr.f32.mxu0 %v1405
      %1617 = vmatmul.mubr.f32.gmra.mrb[0].mxu0 %v1404
      %v1618 = vpop.f32.mrb[0].mxu0
      %v1619 = vadd.f32 %v1549, %v1618
      %v1620 = vpop.f32.mrb[0].mxu0
      %1621 = vdwg.mxu0
      %v1624 = vcombine.high %v747, %v747
      %v1626 = vunpack.c.l.s4 1983009808
      %v1627 = vunpack.c.0.s8 %v1626
      %v1628 = vlaneseq
      %v1629 = vshrl.u32 %v1628, 7
      %v1630 = vsub.s32 %v1627, %v1629
      %v1631 = vrot.slane %v747, %v1630
      %v1633 = vunpack.c.l.s4 1983009808
      %v1634 = vunpack.c.0.s8 %v1633
      %v1635 = vlaneseq
      %v1636 = vshrl.u32 %v1635, 7
      %v1637 = vsub.s32 %v1634, %v1636
      %v1638 = vrot.slane %v1624, %v1637
      %v1639 = vcombine.high %v1631, %v1631
      %v1640 = vcombine.high %v1638, %v1638
      %v1642 = vunpack.c.l.s4 1983009808
      %v1643 = vunpack.c.0.s8 %v1642
      %v1644 = vlaneseq
      %v1645 = vshrl.u32 %v1644, 7
      %v1646 = vsub.s32 %v1643, %v1645
      %v1647 = vrot.slane %v748, %v1646
      %v1648 = vcombine.high %v1647, %v1647
      %1655 = vmatprep.subr.mxu0 0.0
      %1656 = vmatpush1.msra.mxu0 %v1187
      %1657 = vmatprep.subr.mxu0 0.0
      %1658 = vmatpush1.msra.mxu0 %v1188
      %1659 = vmatprep.subr.mxu0 0.0
      %1660 = vmatpush1.msra.mxu0 %v1189
      %1661 = vmatprep.subr.mxu0 0.0
      %1662 = vmatpush1.msra.mxu0 %v1190
      %1663 = vmatprep.subr.mxu0 0.0
      %1664 = vmatpush1.msra.mxu0 %v1191
      %1665 = vmatprep.subr.mxu0 0.0
      %1666 = vmatpush1.msra.mxu0 %v1192
      %1667 = vmatprep.subr.mxu0 0.0
      %1668 = vmatpush1.msra.mxu0 %v1193
      %1669 = vmatprep.subr.mxu0 0.0
      %1670 = vmatpush1.msra.mxu0 %v1194
      %1671 = vmatprep.subr.mxu0 0.0
      %1672 = vmatpush1.msra.mxu0 %v1195
      %1673 = vmatprep.subr.mxu0 0.0
      %1674 = vmatpush1.msra.mxu0 %v1196
      %1675 = vmatprep.subr.mxu0 0.0
      %1676 = vmatpush1.msra.mxu0 %v1197
      %1677 = vmatprep.subr.mxu0 0.0
      %1678 = vmatpush1.msra.mxu0 %v1198
      %1679 = vmatprep.subr.mxu0 0.0
      %1680 = vmatpush1.msra.mxu0 %v1199
      %1681 = vmatprep.subr.mxu0 0.0
      %1682 = vmatpush1.msra.mxu0 %v1200
      %1683 = vmatprep.subr.mxu0 0.0
      %1684 = vmatpush1.msra.mxu0 %v1201
      %1685 = vmatprep.subr.mxu0 0.0
      %1686 = vmatpush1.msra.mxu0 %v1202
      %1687 = vmatprep.subr.mxu0 0.0
      %1688 = vmatpush1.msra.mxu0 %v1203
      %1689 = vmatprep.subr.mxu0 0.0
      %1690 = vmatpush1.msra.mxu0 %v1204
      %1691 = vmatprep.subr.mxu0 0.0
      %1692 = vmatpush1.msra.mxu0 %v1205
      %1693 = vmatprep.subr.mxu0 0.0
      %1694 = vmatpush1.msra.mxu0 %v1206
      %1695 = vmatprep.subr.mxu0 0.0
      %1696 = vmatpush1.msra.mxu0 %v1207
      %1697 = vmatprep.subr.mxu0 0.0
      %1698 = vmatpush1.msra.mxu0 %v1208
      %1699 = vmatprep.subr.mxu0 0.0
      %1700 = vmatpush1.msra.mxu0 %v1209
      %1701 = vmatprep.subr.mxu0 0.0
      %1702 = vmatpush1.msra.mxu0 %v1210
      %1703 = vmatprep.subr.mxu0 0.0
      %1704 = vmatpush1.msra.mxu0 %v1211
      %1705 = vmatprep.subr.mxu0 0.0
      %1706 = vmatpush1.msra.mxu0 %v1212
      %1707 = vmatprep.subr.mxu0 0.0
      %1708 = vmatpush1.msra.mxu0 %v1213
      %1709 = vmatprep.subr.mxu0 0.0
      %1710 = vmatpush1.msra.mxu0 %v1214
      %1711 = vmatprep.subr.mxu0 0.0
      %1712 = vmatpush1.msra.mxu0 %v1215
      %1713 = vmatprep.subr.mxu0 0.0
      %1714 = vmatpush1.msra.mxu0 %v1216
      %1715 = vmatprep.subr.mxu0 0.0
      %1716 = vmatpush1.msra.mxu0 %v1217
      %1717 = vmatprep.subr.mxu0 0.0
      %1718 = vmatpush1.msra.mxu0 %v1218
      %1719 = vmatprep.mubr.f32.mxu0 %v1639
      %1720 = vmatmul.mubr.f32.gmra.mrb[0].mxu0 %v1631
      %v1721 = vpop.f32.mrb[0].mxu0
      %v1722 = vadd.f32 %v1619, %v1721
      %v1723 = vpop.f32.mrb[0].mxu0
      %1724 = vdwg.mxu0
      %1725 = vmatprep.subr.mxu0 0.0
      %1726 = vmatpush1.msra.mxu0 %v1219
      %1727 = vmatprep.subr.mxu0 0.0
      %1728 = vmatpush1.msra.mxu0 %v1220
      %1729 = vmatprep.subr.mxu0 0.0
      %1730 = vmatpush1.msra.mxu0 %v1221
      %1731 = vmatprep.subr.mxu0 0.0
      %1732 = vmatpush1.msra.mxu0 %v1222
      %1733 = vmatprep.subr.mxu0 0.0
      %1734 = vmatpush1.msra.mxu0 %v1223
      %1735 = vmatprep.subr.mxu0 0.0
      %1736 = vmatpush1.msra.mxu0 %v1224
      %1737 = vmatprep.subr.mxu0 0.0
      %1738 = vmatpush1.msra.mxu0 %v1225
      %1739 = vmatprep.subr.mxu0 0.0
      %1740 = vmatpush1.msra.mxu0 %v1226
      %1741 = vmatprep.subr.mxu0 0.0
      %1742 = vmatpush1.msra.mxu0 %v1227
      %1743 = vmatprep.subr.mxu0 0.0
      %1744 = vmatpush1.msra.mxu0 %v1228
      %1745 = vmatprep.subr.mxu0 0.0
      %1746 = vmatpush1.msra.mxu0 %v1229
      %1747 = vmatprep.subr.mxu0 0.0
      %1748 = vmatpush1.msra.mxu0 %v1230
      %1749 = vmatprep.subr.mxu0 0.0
      %1750 = vmatpush1.msra.mxu0 %v1231
      %1751 = vmatprep.subr.mxu0 0.0
      %1752 = vmatpush1.msra.mxu0 %v1232
      %1753 = vmatprep.subr.mxu0 0.0
      %1754 = vmatpush1.msra.mxu0 %v1233
      %1755 = vmatprep.subr.mxu0 0.0
      %1756 = vmatpush1.msra.mxu0 %v1234
      %1757 = vmatprep.subr.mxu0 0.0
      %1758 = vmatpush1.msra.mxu0 %v1235
      %1759 = vmatprep.subr.mxu0 0.0
      %1760 = vmatpush1.msra.mxu0 %v1236
      %1761 = vmatprep.subr.mxu0 0.0
      %1762 = vmatpush1.msra.mxu0 %v1237
      %1763 = vmatprep.subr.mxu0 0.0
      %1764 = vmatpush1.msra.mxu0 %v1238
      %1765 = vmatprep.subr.mxu0 0.0
      %1766 = vmatpush1.msra.mxu0 %v1239
      %1767 = vmatprep.subr.mxu0 0.0
      %1768 = vmatpush1.msra.mxu0 %v1240
      %1769 = vmatprep.subr.mxu0 0.0
      %1770 = vmatpush1.msra.mxu0 %v1241
      %1771 = vmatprep.subr.mxu0 0.0
      %1772 = vmatpush1.msra.mxu0 %v1242
      %1773 = vmatprep.subr.mxu0 0.0
      %1774 = vmatpush1.msra.mxu0 %v1243
      %1775 = vmatprep.subr.mxu0 0.0
      %1776 = vmatpush1.msra.mxu0 %v1244
      %1777 = vmatprep.subr.mxu0 0.0
      %1778 = vmatpush1.msra.mxu0 %v1245
      %1779 = vmatprep.subr.mxu0 0.0
      %1780 = vmatpush1.msra.mxu0 %v1246
      %1781 = vmatprep.subr.mxu0 0.0
      %1782 = vmatpush1.msra.mxu0 %v1247
      %1783 = vmatprep.subr.mxu0 0.0
      %1784 = vmatpush1.msra.mxu0 %v1248
      %1785 = vmatprep.subr.mxu0 0.0
      %1786 = vmatpush1.msra.mxu0 %v1249
      %1787 = vmatprep.subr.mxu0 0.0
      %1788 = vmatpush1.msra.mxu0 %v1250
      %1789 = vmatprep.mubr.f32.mxu0 %v1640
      %1790 = vmatmul.mubr.f32.gmra.mrb[0].mxu0 %v1638
      %v1791 = vpop.f32.mrb[0].mxu0
      %v1792 = vadd.f32 %v1722, %v1791
      %v1793 = vpop.f32.mrb[0].mxu0
      %1794 = vdwg.mxu0
      %1795 = vmatprep.subr.mxu0 0.0
      %1796 = vmatpush1.msra.mxu0 %v1251
      %1797 = vmatprep.subr.mxu0 0.0
      %1798 = vmatpush1.msra.mxu0 %v1252
      %1799 = vmatprep.subr.mxu0 0.0
      %1800 = vmatpush1.msra.mxu0 %v1253
      %1801 = vmatprep.subr.mxu0 0.0
      %1802 = vmatpush1.msra.mxu0 %v1254
      %1803 = vmatprep.subr.mxu0 0.0
      %1804 = vmatpush1.msra.mxu0 %v1255
      %1805 = vmatprep.subr.mxu0 0.0
      %1806 = vmatpush1.msra.mxu0 %v1256
      %1807 = vmatprep.subr.mxu0 0.0
      %1808 = vmatpush1.msra.mxu0 %v1257
      %1809 = vmatprep.subr.mxu0 0.0
      %1810 = vmatpush1.msra.mxu0 %v1258
      %1811 = vmatprep.subr.mxu0 0.0
      %1812 = vmatpush1.msra.mxu0 %v1259
      %1813 = vmatprep.subr.mxu0 0.0
      %1814 = vmatpush1.msra.mxu0 %v1260
      %1815 = vmatprep.subr.mxu0 0.0
      %1816 = vmatpush1.msra.mxu0 %v1261
      %1817 = vmatprep.subr.mxu0 0.0
      %1818 = vmatpush1.msra.mxu0 %v1262
      %1819 = vmatprep.subr.mxu0 0.0
      %1820 = vmatpush1.msra.mxu0 %v1263
      %1821 = vmatprep.subr.mxu0 0.0
      %1822 = vmatpush1.msra.mxu0 %v1264
      %1823 = vmatprep.subr.mxu0 0.0
      %1824 = vmatpush1.msra.mxu0 %v1265
      %1825 = vmatprep.subr.mxu0 0.0
      %1826 = vmatpush1.msra.mxu0 %v1266
      %1827 = vmatprep.subr.mxu0 0.0
      %1828 = vmatpush1.msra.mxu0 %v1267
      %1829 = vmatprep.subr.mxu0 0.0
      %1830 = vmatpush1.msra.mxu0 %v1268
      %1831 = vmatprep.subr.mxu0 0.0
      %1832 = vmatpush1.msra.mxu0 %v1269
      %1833 = vmatprep.subr.mxu0 0.0
      %1834 = vmatpush1.msra.mxu0 %v1270
      %1835 = vmatprep.subr.mxu0 0.0
      %1836 = vmatpush1.msra.mxu0 %v1271
      %1837 = vmatprep.subr.mxu0 0.0
      %1838 = vmatpush1.msra.mxu0 %v1272
      %1839 = vmatprep.subr.mxu0 0.0
      %1840 = vmatpush1.msra.mxu0 %v1273
      %1841 = vmatprep.subr.mxu0 0.0
      %1842 = vmatpush1.msra.mxu0 %v1274
      %1843 = vmatprep.subr.mxu0 0.0
      %1844 = vmatpush1.msra.mxu0 %v1275
      %1845 = vmatprep.subr.mxu0 0.0
      %1846 = vmatpush1.msra.mxu0 %v1276
      %1847 = vmatprep.subr.mxu0 0.0
      %1848 = vmatpush1.msra.mxu0 %v1277
      %1849 = vmatprep.subr.mxu0 0.0
      %1850 = vmatpush1.msra.mxu0 %v1278
      %1851 = vmatprep.subr.mxu0 0.0
      %1852 = vmatpush1.msra.mxu0 %v1279
      %1853 = vmatprep.subr.mxu0 0.0
      %1854 = vmatpush1.msra.mxu0 %v1280
      %1855 = vmatprep.subr.mxu0 0.0
      %1856 = vmatpush1.msra.mxu0 %v1281
      %1857 = vmatprep.subr.mxu0 0.0
      %1858 = vmatpush1.msra.mxu0 %v1282
      %1859 = vmatprep.mubr.f32.mxu0 %v1648
      %1860 = vmatmul.mubr.f32.gmra.mrb[0].mxu0 %v1647
      %v1861 = vpop.f32.mrb[0].mxu0
      %v1862 = vadd.f32 %v1792, %v1861
      %v1863 = vpop.f32.mrb[0].mxu0
      %1864 = vdwg.mxu0
      %v1865 = vld [vmem:[%s5] sm:$0x1]
      %v1867 = vlaneseq
      %v1868 = vshrl.u32 %v1867, 7
      %v1869 = vsub.s32 0, %v1868
      %v1870 = vrot.slane %v1865, %v1869
      %v1872 = vadd.f32 %v1862, %v1870
      %1873 = vst [vmem:[#allocation13] sm:$0x3] %v1872
    $region53: #{tpu_custom_call.1} parent=1 // pred_fallthru
      _
    // Predicated region
    $region54: #{tpu_custom_call.1} parent=1 // pred_check
      _
    $region55: #{tpu_custom_call.1} parent=1 // pred_check_branch
      %1875 = sbr.rel (0) target = $region57
    $region56: #{tpu_custom_call.1} parent=1 // pred_region
      %s1877 = ssub.s32 32, 32
      %1878 = vsyncadd [#allocation6], %s1877
      %s1880 = sshll.u32 [#allocation13], 4
      %s1881 = int_to_ptr.vmem [resolvable:$true] %s1880
      %1883 = dma.vmem_to_hbm [thread:$0]  %s1881, 32, %s6, [#allocation6]
    $region57: #{tpu_custom_call.1} parent=1 // pred_fallthru
      _
    // Predicated region
    $region58: #{tpu_custom_call.1} parent=1 // pred_check
      _
    $region59: #{tpu_custom_call.1} parent=1 // pred_check_branch
      %1885 = sbr.rel (0) target = $region61
    $region60: #{tpu_custom_call.1} parent=1 // pred_region
      %1886 = dma.done [#allocation6], 32
    $region61: #{tpu_custom_call.1} parent=1 // pred_fallthru
      _
    %1887 = vsyncpa [#allocation5], 1
    %1888 = vsyncpa [#allocation8], 1
    %1889 = vsyncpa [#allocation11], 1
    %1890 = vsyncpa [#allocation6], 1

</llo_original>
